<compile_context>
chip_gen: v7x
topology: tpu7x:2x2x1
jax: 0.10.0
libtpu: 0.0.40
codegen_flags: <defaults>
</compile_context>

<pallas_src>
import jax
import jax.numpy as jnp
from jax import lax
from jax.experimental import pallas as pl
from jax.experimental.pallas import tpu as pltpu

BN_EPS = 1e-5


def _down_kernel(xq_ref, w1_ref, g1_ref, be1_ref, w2_ref, g2_ref, be2_ref,
                 out_ref):
    # xq_ref : (4, N, H, W, Cin)  -- leading axis = the 4 taps of each 2x2 pool
    # w1_ref : (9*Cin, CP)        -- packed conv1 weights, out-channels padded
    # w2_ref : (9*CP, CP)         -- packed conv2 weights (padded in & out)
    # g*_ref, be*_ref : (1, CP)   -- BN gamma / beta (zero-padded)
    # out_ref: (M, CP)            -- M = N*H*W, lane-dense (CP = 128k)
    _, N, H, W, Cin = xq_ref.shape
    M, CP = out_ref.shape

    # ---- MaxPool2d(2): 3 element-wise maxes over the pre-arranged taps ----
    xq = xq_ref[...]
    pooled = jnp.maximum(jnp.maximum(xq[0], xq[1]),
                         jnp.maximum(xq[2], xq[3]))          # (N, H, W, Cin)

    def pad_hw(t):
        # zero-pad H and W by 1 (functional; no scratch, no full zero-fill).
        n_, h_, w_, c_ = t.shape
        zr = jnp.zeros((n_, 1, w_, c_), t.dtype)
        t = jnp.concatenate([zr, t, zr], axis=1)             # pad H
        zc = jnp.zeros((n_, h_ + 2, 1, c_), t.dtype)
        return jnp.concatenate([zc, t, zc], axis=2)          # pad W

    def conv3x3(t4, w_ref):
        # Single fused MXU matmul: build (M, 9*C) patches, one jnp.dot.
        c_ = t4.shape[-1]
        tp = pad_hw(t4)
        cols = [tp[:, dy:dy + H, dx:dx + W, :].reshape(M, c_)
                for dy in range(3) for dx in range(3)]
        patches = jnp.concatenate(cols, axis=-1)             # (M, 9*c_)
        return jnp.dot(patches, w_ref[...],
                       preferred_element_type=jnp.float32)   # (M, CP)

    def bn_relu(acc, g_ref, be_ref):
        # One-pass batch statistics: var = E[x^2] - mean^2 (biased, like torch
        # training-mode BN). The conv bias cancels exactly under mean removal,
        # so it is not applied at all.
        inv_m = 1.0 / M
        mean = jnp.sum(acc, axis=0, keepdims=True) * inv_m
        ex2 = jnp.sum(acc * acc, axis=0, keepdims=True) * inv_m
        var = jnp.maximum(ex2 - mean * mean, 0.0)
        scale = g_ref[...] * lax.rsqrt(var + BN_EPS)
        shift = be_ref[...] - mean * scale
        return jnp.maximum(acc * scale + shift, 0.0)

    h1 = bn_relu(conv3x3(pooled, w1_ref), g1_ref, be1_ref)            # (M, CP)
    h2 = bn_relu(conv3x3(h1.reshape(N, H, W, CP), w2_ref), g2_ref, be2_ref)
    out_ref[...] = h2


def down_forward(x_nchw, params):
    """Down.forward: x_nchw (N, Cin, Hin, Win) f32 -> (N, Cout, Hin/2, Win/2)."""
    w1, b1, g1, be1, w2, b2, g2, be2 = params   # b1/b2 cancel under train BN
    del b1, b2
    N, Cin, Hin, Win = x_nchw.shape
    Cout = w1.shape[-1]
    H, W = Hin // 2, Win // 2
    M = N * H * W
    CP = max(128, ((Cout + 127) // 128) * 128)  # lane-dense channel padding

    # Present the input as (4, N, H, W, Cin): leading axis enumerates the 2x2
    # pool window. This fuses with the NCHW->NHWC transpose into one XLA copy.
    x = x_nchw.astype(jnp.float32)
    xq = x.reshape(N, Cin, H, 2, W, 2)
    xq = jnp.transpose(xq, (3, 5, 0, 2, 4, 1)).reshape(4, N, H, W, Cin)

    # Pack weights for the fused patch matmuls; pad channels to CP with zeros.
    w1p = jnp.zeros((3, 3, Cin, CP), jnp.float32)
    w1p = w1p.at[..., :Cout].set(w1.astype(jnp.float32)).reshape(9 * Cin, CP)
    w2p = jnp.zeros((3, 3, CP, CP), jnp.float32)
    w2p = w2p.at[:, :, :Cout, :Cout].set(w2.astype(jnp.float32))
    w2p = w2p.reshape(9 * CP, CP)

    def padp(p):  # (.., Cout) -> (1, CP), zero-padded
        return jnp.zeros((1, CP), jnp.float32).at[:, :Cout].set(
            p.reshape(1, Cout).astype(jnp.float32))

    g1p, be1p, g2p, be2p = padp(g1), padp(be1), padp(g2), padp(be2)

    def full_spec(shape):
        nd = len(shape)
        return pl.BlockSpec(shape, lambda i, _nd=nd: (0,) * _nd)

    flops = 2 * M * (9 * Cin) * CP + 2 * M * (9 * CP) * CP
    bytes_accessed = 4 * (xq.size + w1p.size + w2p.size + 4 * CP + M * CP)
    cost = pl.CostEstimate(flops=flops, transcendentals=2 * CP,
                           bytes_accessed=bytes_accessed)

    out = pl.pallas_call(
        _down_kernel,
        out_shape=jax.ShapeDtypeStruct((M, CP), jnp.float32),
        grid_spec=pltpu.PrefetchScalarGridSpec(
            num_scalar_prefetch=0,
            grid=(1,),
            in_specs=[
                full_spec(xq.shape),
                full_spec(w1p.shape), full_spec(g1p.shape), full_spec(be1p.shape),
                full_spec(w2p.shape), full_spec(g2p.shape), full_spec(be2p.shape),
            ],
            out_specs=full_spec((M, CP)),
        ),
        compiler_params=pltpu.CompilerParams(
            dimension_semantics=("arbitrary",),
            vmem_limit_bytes=32 * 1024 * 1024),
        cost_estimate=cost,
    )(xq, w1p, g1p, be1p, w2p, g2p, be2p)

    out_nhwc = out.reshape(N, H, W, CP)[..., :Cout]
    return jnp.transpose(out_nhwc, (0, 3, 1, 2))              # NHWC -> NCHW


def ref_down(x_nchw, params):
    """Pure-JAX reference (matches PyTorch training-mode forward, incl. bias)."""
    w1, b1, g1, be1, w2, b2, g2, be2 = params
    x = jnp.transpose(x_nchw, (0, 2, 3, 1))                    # NCHW -> NHWC
    N, Hin, Win, C = x.shape
    x = x.reshape(N, Hin // 2, 2, Win // 2, 2, C).max(axis=(2, 4))  # MaxPool2d(2)

    def conv(x, w, b):
        y = lax.conv_general_dilated(
            x, w, window_strides=(1, 1), padding="SAME",
            dimension_numbers=("NHWC", "HWIO", "NHWC"))
        return y + b.reshape(1, 1, 1, -1)

    def bn_relu(x, g, be):
        m = jnp.mean(x, axis=(0, 1, 2), keepdims=True)
        v = jnp.mean((x - m) ** 2, axis=(0, 1, 2), keepdims=True)
        y = (x - m) * lax.rsqrt(v + BN_EPS) * g.reshape(1, 1, 1, -1) \
            + be.reshape(1, 1, 1, -1)
        return jnp.maximum(y, 0.0)

    h = bn_relu(conv(x, w1, b1), g1, be1)
    h = bn_relu(conv(h, w2, b2), g2, be2)
    return jnp.transpose(h, (0, 3, 1, 2))


if __name__ == "__main__":
    N, Cin, Cout, Hin, Win = 2, 4, 8, 16, 16

    key = jax.random.PRNGKey(0)
    k = jax.random.split(key, 9)
    w1 = 0.1 * jax.random.normal(k[0], (3, 3, Cin, Cout), jnp.float32)
    b1 = 0.1 * jax.random.normal(k[1], (1, Cout), jnp.float32)
    g1 = 1.0 + 0.1 * jax.random.normal(k[2], (1, Cout), jnp.float32)
    be1 = 0.1 * jax.random.normal(k[3], (1, Cout), jnp.float32)
    w2 = 0.1 * jax.random.normal(k[4], (3, 3, Cout, Cout), jnp.float32)
    b2 = 0.1 * jax.random.normal(k[5], (1, Cout), jnp.float32)
    g2 = 1.0 + 0.1 * jax.random.normal(k[6], (1, Cout), jnp.float32)
    be2 = 0.1 * jax.random.normal(k[7], (1, Cout), jnp.float32)
    params = (w1, b1, g1, be1, w2, b2, g2, be2)

    x = jax.random.normal(k[8], (N, Cin, Hin, Win), jnp.float32)

    out = jax.block_until_ready(down_forward(x, params))
    ref = jax.block_until_ready(ref_down(x, params))

    assert out.shape == (N, Cout, Hin // 2, Win // 2), out.shape
    err = float(jnp.max(jnp.abs(out - ref)))
    assert err < 1e-3, f"mismatch vs reference: {err}"
    print("KERNEL_OK")
</pallas_src>

<mosaic_0001>
module attributes {stable_mosaic.version = 11 : i64} {
  func.func @_down_kernel(%arg0: i32, %arg1: memref<4x2x8x8x4xf32, #tpu.memory_space<vmem>>, %arg2: memref<36x128xf32, #tpu.memory_space<vmem>>, %arg3: memref<1x128xf32, #tpu.memory_space<vmem>>, %arg4: memref<1x128xf32, #tpu.memory_space<vmem>>, %arg5: memref<1152x128xf32, #tpu.memory_space<vmem>>, %arg6: memref<1x128xf32, #tpu.memory_space<vmem>>, %arg7: memref<1x128xf32, #tpu.memory_space<vmem>>, %arg8: memref<128x128xf32, #tpu.memory_space<vmem>>) attributes {dimension_semantics = [#tpu.dimension_semantics<arbitrary>], iteration_bounds = array<i64: 1>, scalar_prefetch = 0 : i64, scratch_operands = 0 : i64, tpu.core_type = #tpu.core_type<tc>, window_params = [{pipeline_mode = #tpu.pipeline_mode<synchronous>, transform_indices = @transform_0, window_bounds = array<i64: 4, 2, 8, 8, 4>}, {pipeline_mode = #tpu.pipeline_mode<synchronous>, transform_indices = @transform_1, window_bounds = array<i64: 36, 128>}, {pipeline_mode = #tpu.pipeline_mode<synchronous>, transform_indices = @transform_2, window_bounds = array<i64: 1, 128>}, {pipeline_mode = #tpu.pipeline_mode<synchronous>, transform_indices = @transform_3, window_bounds = array<i64: 1, 128>}, {pipeline_mode = #tpu.pipeline_mode<synchronous>, transform_indices = @transform_4, window_bounds = array<i64: 1152, 128>}, {pipeline_mode = #tpu.pipeline_mode<synchronous>, transform_indices = @transform_5, window_bounds = array<i64: 1, 128>}, {pipeline_mode = #tpu.pipeline_mode<synchronous>, transform_indices = @transform_6, window_bounds = array<i64: 1, 128>}, {pipeline_mode = #tpu.pipeline_mode<synchronous>, transform_indices = @transform_7, window_bounds = array<i64: 128, 128>}]} {
    %c0 = arith.constant 0 : index
    %c0_0 = arith.constant 0 : index
    %c0_1 = arith.constant 0 : index
    %c0_2 = arith.constant 0 : index
    %c0_3 = arith.constant 0 : index
    %0 = vector.load %arg1[%c0, %c0_0, %c0_1, %c0_2, %c0_3] : memref<4x2x8x8x4xf32, #tpu.memory_space<vmem>>, vector<4x2x8x8x4xf32>
    %1 = vector.extract_strided_slice %0 {offsets = [0, 0, 0, 0, 0], sizes = [1, 2, 8, 8, 4], strides = [1, 1, 1, 1, 1]} : vector<4x2x8x8x4xf32> to vector<1x2x8x8x4xf32>
    %2 = vector.shape_cast %1 : vector<1x2x8x8x4xf32> to vector<2x8x8x4xf32>
    %3 = vector.extract_strided_slice %0 {offsets = [1, 0, 0, 0, 0], sizes = [1, 2, 8, 8, 4], strides = [1, 1, 1, 1, 1]} : vector<4x2x8x8x4xf32> to vector<1x2x8x8x4xf32>
    %4 = vector.shape_cast %3 : vector<1x2x8x8x4xf32> to vector<2x8x8x4xf32>
    %5 = arith.maximumf %2, %4 : vector<2x8x8x4xf32>
    %6 = vector.extract_strided_slice %0 {offsets = [2, 0, 0, 0, 0], sizes = [1, 2, 8, 8, 4], strides = [1, 1, 1, 1, 1]} : vector<4x2x8x8x4xf32> to vector<1x2x8x8x4xf32>
    %7 = vector.shape_cast %6 : vector<1x2x8x8x4xf32> to vector<2x8x8x4xf32>
    %8 = vector.extract_strided_slice %0 {offsets = [3, 0, 0, 0, 0], sizes = [1, 2, 8, 8, 4], strides = [1, 1, 1, 1, 1]} : vector<4x2x8x8x4xf32> to vector<1x2x8x8x4xf32>
    %9 = vector.shape_cast %8 : vector<1x2x8x8x4xf32> to vector<2x8x8x4xf32>
    %10 = arith.maximumf %7, %9 : vector<2x8x8x4xf32>
    %11 = arith.maximumf %5, %10 : vector<2x8x8x4xf32>
    %cst = arith.constant 0.000000e+00 : f32
    %12 = vector.broadcast %cst : f32 to vector<2x1x8x4xf32>
    %13 = tpu.concatenate %12, %11, %12 in 1 : vector<2x1x8x4xf32>, vector<2x8x8x4xf32>, vector<2x1x8x4xf32> -> vector<2x10x8x4xf32>
    %cst_4 = arith.constant 0.000000e+00 : f32
    %14 = vector.broadcast %cst_4 : f32 to vector<2x10x1x4xf32>
    %15 = tpu.concatenate %14, %13, %14 in 2 : vector<2x10x1x4xf32>, vector<2x10x8x4xf32>, vector<2x10x1x4xf32> -> vector<2x10x10x4xf32>
    %16 = vector.extract_strided_slice %15 {offsets = [0, 0, 0, 0], sizes = [2, 8, 8, 4], strides = [1, 1, 1, 1]} : vector<2x10x10x4xf32> to vector<2x8x8x4xf32>
    %17 = vector.shape_cast %16 : vector<2x8x8x4xf32> to vector<128x4xf32>
    %18 = vector.extract_strided_slice %15 {offsets = [0, 0, 1, 0], sizes = [2, 8, 8, 4], strides = [1, 1, 1, 1]} : vector<2x10x10x4xf32> to vector<2x8x8x4xf32>
    %19 = vector.shape_cast %18 : vector<2x8x8x4xf32> to vector<128x4xf32>
    %20 = vector.extract_strided_slice %15 {offsets = [0, 0, 2, 0], sizes = [2, 8, 8, 4], strides = [1, 1, 1, 1]} : vector<2x10x10x4xf32> to vector<2x8x8x4xf32>
    %21 = vector.shape_cast %20 : vector<2x8x8x4xf32> to vector<128x4xf32>
    %22 = vector.extract_strided_slice %15 {offsets = [0, 1, 0, 0], sizes = [2, 8, 8, 4], strides = [1, 1, 1, 1]} : vector<2x10x10x4xf32> to vector<2x8x8x4xf32>
    %23 = vector.shape_cast %22 : vector<2x8x8x4xf32> to vector<128x4xf32>
    %24 = vector.extract_strided_slice %15 {offsets = [0, 1, 1, 0], sizes = [2, 8, 8, 4], strides = [1, 1, 1, 1]} : vector<2x10x10x4xf32> to vector<2x8x8x4xf32>
    %25 = vector.shape_cast %24 : vector<2x8x8x4xf32> to vector<128x4xf32>
    %26 = vector.extract_strided_slice %15 {offsets = [0, 1, 2, 0], sizes = [2, 8, 8, 4], strides = [1, 1, 1, 1]} : vector<2x10x10x4xf32> to vector<2x8x8x4xf32>
    %27 = vector.shape_cast %26 : vector<2x8x8x4xf32> to vector<128x4xf32>
    %28 = vector.extract_strided_slice %15 {offsets = [0, 2, 0, 0], sizes = [2, 8, 8, 4], strides = [1, 1, 1, 1]} : vector<2x10x10x4xf32> to vector<2x8x8x4xf32>
    %29 = vector.shape_cast %28 : vector<2x8x8x4xf32> to vector<128x4xf32>
    %30 = vector.extract_strided_slice %15 {offsets = [0, 2, 1, 0], sizes = [2, 8, 8, 4], strides = [1, 1, 1, 1]} : vector<2x10x10x4xf32> to vector<2x8x8x4xf32>
    %31 = vector.shape_cast %30 : vector<2x8x8x4xf32> to vector<128x4xf32>
    %32 = vector.extract_strided_slice %15 {offsets = [0, 2, 2, 0], sizes = [2, 8, 8, 4], strides = [1, 1, 1, 1]} : vector<2x10x10x4xf32> to vector<2x8x8x4xf32>
    %33 = vector.shape_cast %32 : vector<2x8x8x4xf32> to vector<128x4xf32>
    %34 = tpu.concatenate %17, %19, %21, %23, %25, %27, %29, %31, %33 in 1 : vector<128x4xf32>, vector<128x4xf32>, vector<128x4xf32>, vector<128x4xf32>, vector<128x4xf32>, vector<128x4xf32>, vector<128x4xf32>, vector<128x4xf32>, vector<128x4xf32> -> vector<128x36xf32>
    %c0_5 = arith.constant 0 : index
    %c0_6 = arith.constant 0 : index
    %35 = vector.load %arg2[%c0_5, %c0_6] : memref<36x128xf32, #tpu.memory_space<vmem>>, vector<36x128xf32>
    %cst_7 = arith.constant dense<0.000000e+00> : vector<128x128xf32>
    %36 = tpu.matmul %34, %35, %cst_7 {dimension_numbers = #tpu.dot_dimension_numbers<[1], [0], [0], [1], [0, 0, 1, 1], [], []>} : vector<128x36xf32>, vector<36x128xf32>, vector<128x128xf32> -> vector<128x128xf32>
    %cst_8 = arith.constant dense<0.000000e+00> : vector<128xf32>
    %37 = vector.multi_reduction <add>, %36, %cst_8 [0] : vector<128x128xf32> to vector<128xf32>
    %38 = vector.shape_cast %37 : vector<128xf32> to vector<1x128xf32>
    %cst_9 = arith.constant 7.812500e-03 : f32
    %39 = vector.broadcast %cst_9 : f32 to vector<1x128xf32>
    %40 = arith.mulf %38, %39 : vector<1x128xf32>
    %41 = arith.mulf %36, %36 : vector<128x128xf32>
    %cst_10 = arith.constant dense<0.000000e+00> : vector<128xf32>
    %42 = vector.multi_reduction <add>, %41, %cst_10 [0] : vector<128x128xf32> to vector<128xf32>
    %43 = vector.shape_cast %42 : vector<128xf32> to vector<1x128xf32>
    %cst_11 = arith.constant 7.812500e-03 : f32
    %44 = vector.broadcast %cst_11 : f32 to vector<1x128xf32>
    %45 = arith.mulf %43, %44 : vector<1x128xf32>
    %46 = arith.mulf %40, %40 : vector<1x128xf32>
    %47 = arith.subf %45, %46 : vector<1x128xf32>
    %cst_12 = arith.constant 0.000000e+00 : f32
    %48 = vector.broadcast %cst_12 : f32 to vector<1x128xf32>
    %49 = arith.maximumf %47, %48 : vector<1x128xf32>
    %c0_13 = arith.constant 0 : index
    %c0_14 = arith.constant 0 : index
    %50 = vector.load %arg3[%c0_13, %c0_14] : memref<1x128xf32, #tpu.memory_space<vmem>>, vector<1x128xf32>
    %cst_15 = arith.constant 9.99999974E-6 : f32
    %51 = vector.broadcast %cst_15 : f32 to vector<1x128xf32>
    %52 = arith.addf %49, %51 : vector<1x128xf32>
    %53 = math.rsqrt %52 : vector<1x128xf32>
    %54 = arith.mulf %50, %53 : vector<1x128xf32>
    %c0_16 = arith.constant 0 : index
    %c0_17 = arith.constant 0 : index
    %55 = vector.load %arg4[%c0_16, %c0_17] : memref<1x128xf32, #tpu.memory_space<vmem>>, vector<1x128xf32>
    %56 = arith.mulf %40, %54 : vector<1x128xf32>
    %57 = arith.subf %55, %56 : vector<1x128xf32>
    %58 = vector.broadcast %54 : vector<1x128xf32> to vector<128x128xf32>
    %59 = arith.mulf %36, %58 : vector<128x128xf32>
    %60 = vector.broadcast %57 : vector<1x128xf32> to vector<128x128xf32>
    %61 = arith.addf %59, %60 : vector<128x128xf32>
    %cst_18 = arith.constant 0.000000e+00 : f32
    %62 = vector.broadcast %cst_18 : f32 to vector<128x128xf32>
    %63 = arith.maximumf %61, %62 : vector<128x128xf32>
    %64 = vector.shape_cast %63 : vector<128x128xf32> to vector<2x8x8x128xf32>
    %cst_19 = arith.constant 0.000000e+00 : f32
    %65 = vector.broadcast %cst_19 : f32 to vector<2x1x8x128xf32>
    %66 = tpu.concatenate %65, %64, %65 in 1 : vector<2x1x8x128xf32>, vector<2x8x8x128xf32>, vector<2x1x8x128xf32> -> vector<2x10x8x128xf32>
    %cst_20 = arith.constant 0.000000e+00 : f32
    %67 = vector.broadcast %cst_20 : f32 to vector<2x10x1x128xf32>
    %68 = tpu.concatenate %67, %66, %67 in 2 : vector<2x10x1x128xf32>, vector<2x10x8x128xf32>, vector<2x10x1x128xf32> -> vector<2x10x10x128xf32>
    %69 = vector.extract_strided_slice %68 {offsets = [0, 0, 0, 0], sizes = [2, 8, 8, 128], strides = [1, 1, 1, 1]} : vector<2x10x10x128xf32> to vector<2x8x8x128xf32>
    %70 = vector.shape_cast %69 : vector<2x8x8x128xf32> to vector<128x128xf32>
    %71 = vector.extract_strided_slice %68 {offsets = [0, 0, 1, 0], sizes = [2, 8, 8, 128], strides = [1, 1, 1, 1]} : vector<2x10x10x128xf32> to vector<2x8x8x128xf32>
    %72 = vector.shape_cast %71 : vector<2x8x8x128xf32> to vector<128x128xf32>
    %73 = vector.extract_strided_slice %68 {offsets = [0, 0, 2, 0], sizes = [2, 8, 8, 128], strides = [1, 1, 1, 1]} : vector<2x10x10x128xf32> to vector<2x8x8x128xf32>
    %74 = vector.shape_cast %73 : vector<2x8x8x128xf32> to vector<128x128xf32>
    %75 = vector.extract_strided_slice %68 {offsets = [0, 1, 0, 0], sizes = [2, 8, 8, 128], strides = [1, 1, 1, 1]} : vector<2x10x10x128xf32> to vector<2x8x8x128xf32>
    %76 = vector.shape_cast %75 : vector<2x8x8x128xf32> to vector<128x128xf32>
    %77 = vector.extract_strided_slice %68 {offsets = [0, 1, 1, 0], sizes = [2, 8, 8, 128], strides = [1, 1, 1, 1]} : vector<2x10x10x128xf32> to vector<2x8x8x128xf32>
    %78 = vector.shape_cast %77 : vector<2x8x8x128xf32> to vector<128x128xf32>
    %79 = vector.extract_strided_slice %68 {offsets = [0, 1, 2, 0], sizes = [2, 8, 8, 128], strides = [1, 1, 1, 1]} : vector<2x10x10x128xf32> to vector<2x8x8x128xf32>
    %80 = vector.shape_cast %79 : vector<2x8x8x128xf32> to vector<128x128xf32>
    %81 = vector.extract_strided_slice %68 {offsets = [0, 2, 0, 0], sizes = [2, 8, 8, 128], strides = [1, 1, 1, 1]} : vector<2x10x10x128xf32> to vector<2x8x8x128xf32>
    %82 = vector.shape_cast %81 : vector<2x8x8x128xf32> to vector<128x128xf32>
    %83 = vector.extract_strided_slice %68 {offsets = [0, 2, 1, 0], sizes = [2, 8, 8, 128], strides = [1, 1, 1, 1]} : vector<2x10x10x128xf32> to vector<2x8x8x128xf32>
    %84 = vector.shape_cast %83 : vector<2x8x8x128xf32> to vector<128x128xf32>
    %85 = vector.extract_strided_slice %68 {offsets = [0, 2, 2, 0], sizes = [2, 8, 8, 128], strides = [1, 1, 1, 1]} : vector<2x10x10x128xf32> to vector<2x8x8x128xf32>
    %86 = vector.shape_cast %85 : vector<2x8x8x128xf32> to vector<128x128xf32>
    %87 = tpu.concatenate %70, %72, %74, %76, %78, %80, %82, %84, %86 in 1 : vector<128x128xf32>, vector<128x128xf32>, vector<128x128xf32>, vector<128x128xf32>, vector<128x128xf32>, vector<128x128xf32>, vector<128x128xf32>, vector<128x128xf32>, vector<128x128xf32> -> vector<128x1152xf32>
    %c0_21 = arith.constant 0 : index
    %c0_22 = arith.constant 0 : index
    %88 = vector.load %arg5[%c0_21, %c0_22] : memref<1152x128xf32, #tpu.memory_space<vmem>>, vector<1152x128xf32>
    %cst_23 = arith.constant dense<0.000000e+00> : vector<128x128xf32>
    %89 = tpu.matmul %87, %88, %cst_23 {dimension_numbers = #tpu.dot_dimension_numbers<[1], [0], [0], [1], [0, 0, 1, 1], [], []>} : vector<128x1152xf32>, vector<1152x128xf32>, vector<128x128xf32> -> vector<128x128xf32>
    %cst_24 = arith.constant dense<0.000000e+00> : vector<128xf32>
    %90 = vector.multi_reduction <add>, %89, %cst_24 [0] : vector<128x128xf32> to vector<128xf32>
    %91 = vector.shape_cast %90 : vector<128xf32> to vector<1x128xf32>
    %cst_25 = arith.constant 7.812500e-03 : f32
    %92 = vector.broadcast %cst_25 : f32 to vector<1x128xf32>
    %93 = arith.mulf %91, %92 : vector<1x128xf32>
    %94 = arith.mulf %89, %89 : vector<128x128xf32>
    %cst_26 = arith.constant dense<0.000000e+00> : vector<128xf32>
    %95 = vector.multi_reduction <add>, %94, %cst_26 [0] : vector<128x128xf32> to vector<128xf32>
    %96 = vector.shape_cast %95 : vector<128xf32> to vector<1x128xf32>
    %cst_27 = arith.constant 7.812500e-03 : f32
    %97 = vector.broadcast %cst_27 : f32 to vector<1x128xf32>
    %98 = arith.mulf %96, %97 : vector<1x128xf32>
    %99 = arith.mulf %93, %93 : vector<1x128xf32>
    %100 = arith.subf %98, %99 : vector<1x128xf32>
    %cst_28 = arith.constant 0.000000e+00 : f32
    %101 = vector.broadcast %cst_28 : f32 to vector<1x128xf32>
    %102 = arith.maximumf %100, %101 : vector<1x128xf32>
    %c0_29 = arith.constant 0 : index
    %c0_30 = arith.constant 0 : index
    %103 = vector.load %arg6[%c0_29, %c0_30] : memref<1x128xf32, #tpu.memory_space<vmem>>, vector<1x128xf32>
    %cst_31 = arith.constant 9.99999974E-6 : f32
    %104 = vector.broadcast %cst_31 : f32 to vector<1x128xf32>
    %105 = arith.addf %102, %104 : vector<1x128xf32>
    %106 = math.rsqrt %105 : vector<1x128xf32>
    %107 = arith.mulf %103, %106 : vector<1x128xf32>
    %c0_32 = arith.constant 0 : index
    %c0_33 = arith.constant 0 : index
    %108 = vector.load %arg7[%c0_32, %c0_33] : memref<1x128xf32, #tpu.memory_space<vmem>>, vector<1x128xf32>
    %109 = arith.mulf %93, %107 : vector<1x128xf32>
    %110 = arith.subf %108, %109 : vector<1x128xf32>
    %111 = vector.broadcast %107 : vector<1x128xf32> to vector<128x128xf32>
    %112 = arith.mulf %89, %111 : vector<128x128xf32>
    %113 = vector.broadcast %110 : vector<1x128xf32> to vector<128x128xf32>
    %114 = arith.addf %112, %113 : vector<128x128xf32>
    %cst_34 = arith.constant 0.000000e+00 : f32
    %115 = vector.broadcast %cst_34 : f32 to vector<128x128xf32>
    %116 = arith.maximumf %114, %115 : vector<128x128xf32>
    %c0_35 = arith.constant 0 : index
    %c0_36 = arith.constant 0 : index
    %117 = vector.load %arg8[%c0_35, %c0_36] : memref<128x128xf32, #tpu.memory_space<vmem>>, vector<128x128xf32>
    tpu.vector_store %arg8[%c0_35, %c0_36], %116 {strides = array<i32>} : memref<128x128xf32, #tpu.memory_space<vmem>>, vector<128x128xf32>,
    return
  }
  func.func @transform_0(%arg0: i32) -> (i32, i32, i32, i32, i32) {
    %c0_i32 = arith.constant 0 : i32
    %c0_i32_0 = arith.constant 0 : i32
    %c0_i32_1 = arith.constant 0 : i32
    %c0_i32_2 = arith.constant 0 : i32
    %c0_i32_3 = arith.constant 0 : i32
    %c0_i32_4 = arith.constant 0 : i32
    return %c0_i32, %c0_i32_0, %c0_i32_1, %c0_i32_2, %c0_i32_3 : i32, i32, i32, i32, i32
  }
  func.func @transform_1(%arg0: i32) -> (i32, i32) {
    %c0_i32 = arith.constant 0 : i32
    %c0_i32_0 = arith.constant 0 : i32
    %c0_i32_1 = arith.constant 0 : i32
    return %c0_i32, %c0_i32_0 : i32, i32
  }
  func.func @transform_2(%arg0: i32) -> (i32, i32) {
    %c0_i32 = arith.constant 0 : i32
    %c0_i32_0 = arith.constant 0 : i32
    %c0_i32_1 = arith.constant 0 : i32
    return %c0_i32, %c0_i32_0 : i32, i32
  }
  func.func @transform_3(%arg0: i32) -> (i32, i32) {
    %c0_i32 = arith.constant 0 : i32
    %c0_i32_0 = arith.constant 0 : i32
    %c0_i32_1 = arith.constant 0 : i32
    return %c0_i32, %c0_i32_0 : i32, i32
  }
  func.func @transform_4(%arg0: i32) -> (i32, i32) {
    %c0_i32 = arith.constant 0 : i32
    %c0_i32_0 = arith.constant 0 : i32
    %c0_i32_1 = arith.constant 0 : i32
    return %c0_i32, %c0_i32_0 : i32, i32
  }
  func.func @transform_5(%arg0: i32) -> (i32, i32) {
    %c0_i32 = arith.constant 0 : i32
    %c0_i32_0 = arith.constant 0 : i32
    %c0_i32_1 = arith.constant 0 : i32
    return %c0_i32, %c0_i32_0 : i32, i32
  }
  func.func @transform_6(%arg0: i32) -> (i32, i32) {
    %c0_i32 = arith.constant 0 : i32
    %c0_i32_0 = arith.constant 0 : i32
    %c0_i32_1 = arith.constant 0 : i32
    return %c0_i32, %c0_i32_0 : i32, i32
  }
  func.func @transform_7(%arg0: i32) -> (i32, i32) {
    %c0_i32 = arith.constant 0 : i32
    %c0_i32_0 = arith.constant 0 : i32
    %c0_i32_1 = arith.constant 0 : i32
    return %c0_i32, %c0_i32_0 : i32, i32
  }
}

</mosaic_0001>

<llo_original>
// kernel: tpu_custom_call.1
$region0: #{tpu_custom_call.1}
  #allocation0 [shape = 'u32[]', space=smem, size = 0x4, offset = 0x4, fixed_abs, tag = 'smem constant byte address 0x4 - core index']
  #allocation1 [shape = 'u32[144,128]{1,0:T(1,128)}', space=vmem, size = 0x12000, scoped, tag = 'internal scratch']
  %s0 = inlined_call_operand.vmem [shape: f32[4,2,8,8,4], index: 0, kind: input, shape index: {}]
  %s1 = inlined_call_operand.vmem [shape: f32[36,128], index: 1, kind: input, shape index: {}]
  %s2 = inlined_call_operand.vmem [shape: f32[1,128], index: 2, kind: input, shape index: {}]
  %s3 = inlined_call_operand.vmem [shape: f32[1,128], index: 3, kind: input, shape index: {}]
  %s4 = inlined_call_operand.hbm [shape: f32[1152,128], index: 4, kind: input, shape index: {}]
  %s5 = inlined_call_operand.vmem [shape: f32[1,128], index: 5, kind: input, shape index: {}]
  %s6 = inlined_call_operand.vmem [shape: f32[1,128], index: 6, kind: input, shape index: {}]
  %s7 = inlined_call_operand.hbm [shape: f32[128,128], index: 7, kind: output, shape index: {}]
  %s8 = sld [smem:[#allocation0]]
  $region42: #{tpu_custom_call.1} parent=0
    _
  %s10 = ssub.s32 1, %s8
  %s11 = scalar_select 0, %s10, %s8
  $region1: #{tpu_custom_call.1} parent=0
    #allocation2 [shape = 'u8[589824]{0}', space=vmem, size = 0x90000, scoped, tag = 'input window, operand 4, single buffered']
    #allocation3 [shape = 's32[1]{0}', space=sflag, size = 0x4, scoped, tag = 'scoped memory for tpu_custom_call.1']
    #allocation4 [shape = 's32[1]{0}', space=sflag, size = 0x4, scoped, tag = 'scoped memory for tpu_custom_call.1']
    #allocation5 [shape = 'u8[65536]{0}', space=vmem, size = 0x10000, scoped, tag = 'output window, operand 0, single buffered']
    %12 = vsyncpa [#allocation3], 0
    %13 = vsyncpa [#allocation4], 0
    // Predicated region
    $region2: #{tpu_custom_call.1} parent=1 // pred_check
      _
    $region3: #{tpu_custom_call.1} parent=1 // pred_check_branch
      %15 = sbr.rel (0) target = $region5
    $region4: #{tpu_custom_call.1} parent=1 // pred_region
      _
    $region5: #{tpu_custom_call.1} parent=1 // pred_fallthru
      _
    // Predicated region
    $region6: #{tpu_custom_call.1} parent=1 // pred_check
      _
    $region7: #{tpu_custom_call.1} parent=1 // pred_check_branch
      %17 = sbr.rel (0) target = $region9
    $region8: #{tpu_custom_call.1} parent=1 // pred_region
      _
    $region9: #{tpu_custom_call.1} parent=1 // pred_fallthru
      _
    // Predicated region
    $region10: #{tpu_custom_call.1} parent=1 // pred_check
      _
    $region11: #{tpu_custom_call.1} parent=1 // pred_check_branch
      %19 = sbr.rel (0) target = $region13
    $region12: #{tpu_custom_call.1} parent=1 // pred_region
      _
    $region13: #{tpu_custom_call.1} parent=1 // pred_fallthru
      _
    // Predicated region
    $region14: #{tpu_custom_call.1} parent=1 // pred_check
      _
    $region15: #{tpu_custom_call.1} parent=1 // pred_check_branch
      %21 = sbr.rel (0) target = $region17
    $region16: #{tpu_custom_call.1} parent=1 // pred_region
      _
    $region17: #{tpu_custom_call.1} parent=1 // pred_fallthru
      _
    // Predicated region
    $region18: #{tpu_custom_call.1} parent=1 // pred_check
      _
    $region19: #{tpu_custom_call.1} parent=1 // pred_check_branch
      %23 = sbr.rel (0) target = $region21
    $region20: #{tpu_custom_call.1} parent=1 // pred_region
      %s25 = ssub.s32 18432, 18432
      %26 = vsyncadd [#allocation3], %s25
      %s27 = sshll.u32 [#allocation2], 4
      %s28 = int_to_ptr.vmem [resolvable:$true] %s27
      %33 = dma.hbm_to_vmem [thread:$0]  %s4, 18432, %s28, [#allocation3], 128, 128, 8
    $region21: #{tpu_custom_call.1} parent=1 // pred_fallthru
      _
    // Predicated region
    $region22: #{tpu_custom_call.1} parent=1 // pred_check
      _
    $region23: #{tpu_custom_call.1} parent=1 // pred_check_branch
      %35 = sbr.rel (0) target = $region25
    $region24: #{tpu_custom_call.1} parent=1 // pred_region
      _
    $region25: #{tpu_custom_call.1} parent=1 // pred_fallthru
      _
    // Predicated region
    $region26: #{tpu_custom_call.1} parent=1 // pred_check
      _
    $region27: #{tpu_custom_call.1} parent=1 // pred_check_branch
      %37 = sbr.rel (0) target = $region29
    $region28: #{tpu_custom_call.1} parent=1 // pred_region
      _
    $region29: #{tpu_custom_call.1} parent=1 // pred_fallthru
      _
    // Predicated region
    $region30: #{tpu_custom_call.1} parent=1 // pred_check
      _
    $region31: #{tpu_custom_call.1} parent=1 // pred_check_branch
      %39 = sbr.rel (0) target = $region33
    $region32: #{tpu_custom_call.1} parent=1 // pred_region
      %40 = dma.done [#allocation3], 18432
    $region33: #{tpu_custom_call.1} parent=1 // pred_fallthru
      _
    %v41 = vld [vmem:[%s0] sm:$0xff]
    %v42 = vld [vmem:[%s0 + $0x8] sm:$0xff]
    %v43 = vld [vmem:[%s0 + $0x10] sm:$0xff]
    %v44 = vld [vmem:[%s0 + $0x18] sm:$0xff]
    %v45 = vld [vmem:[%s0 + $0x20] sm:$0xff]
    %v46 = vld [vmem:[%s0 + $0x28] sm:$0xff]
    %v47 = vld [vmem:[%s0 + $0x30] sm:$0xff]
    %v48 = vld [vmem:[%s0 + $0x38] sm:$0xff]
    %v49 = vld [vmem:[%s0 + $0x40] sm:$0xff]
    %v50 = vld [vmem:[%s0 + $0x48] sm:$0xff]
    %v51 = vld [vmem:[%s0 + $0x50] sm:$0xff]
    %v52 = vld [vmem:[%s0 + $0x58] sm:$0xff]
    %v53 = vld [vmem:[%s0 + $0x60] sm:$0xff]
    %v54 = vld [vmem:[%s0 + $0x68] sm:$0xff]
    %v55 = vld [vmem:[%s0 + $0x70] sm:$0xff]
    %v56 = vld [vmem:[%s0 + $0x78] sm:$0xff]
    %v57 = vld [vmem:[%s0 + $0x80] sm:$0xff]
    %v58 = vld [vmem:[%s0 + $0x88] sm:$0xff]
    %v59 = vld [vmem:[%s0 + $0x90] sm:$0xff]
    %v60 = vld [vmem:[%s0 + $0x98] sm:$0xff]
    %v61 = vld [vmem:[%s0 + $0xa0] sm:$0xff]
    %v62 = vld [vmem:[%s0 + $0xa8] sm:$0xff]
    %v63 = vld [vmem:[%s0 + $0xb0] sm:$0xff]
    %v64 = vld [vmem:[%s0 + $0xb8] sm:$0xff]
    %v65 = vld [vmem:[%s0 + $0xc0] sm:$0xff]
    %v66 = vld [vmem:[%s0 + $0xc8] sm:$0xff]
    %v67 = vld [vmem:[%s0 + $0xd0] sm:$0xff]
    %v68 = vld [vmem:[%s0 + $0xd8] sm:$0xff]
    %v69 = vld [vmem:[%s0 + $0xe0] sm:$0xff]
    %v70 = vld [vmem:[%s0 + $0xe8] sm:$0xff]
    %v71 = vld [vmem:[%s0 + $0xf0] sm:$0xff]
    %v72 = vld [vmem:[%s0 + $0xf8] sm:$0xff]
    %v73 = vld [vmem:[%s0 + $0x100] sm:$0xff]
    %v74 = vld [vmem:[%s0 + $0x108] sm:$0xff]
    %v75 = vld [vmem:[%s0 + $0x110] sm:$0xff]
    %v76 = vld [vmem:[%s0 + $0x118] sm:$0xff]
    %v77 = vld [vmem:[%s0 + $0x120] sm:$0xff]
    %v78 = vld [vmem:[%s0 + $0x128] sm:$0xff]
    %v79 = vld [vmem:[%s0 + $0x130] sm:$0xff]
    %v80 = vld [vmem:[%s0 + $0x138] sm:$0xff]
    %v81 = vld [vmem:[%s0 + $0x140] sm:$0xff]
    %v82 = vld [vmem:[%s0 + $0x148] sm:$0xff]
    %v83 = vld [vmem:[%s0 + $0x150] sm:$0xff]
    %v84 = vld [vmem:[%s0 + $0x158] sm:$0xff]
    %v85 = vld [vmem:[%s0 + $0x160] sm:$0xff]
    %v86 = vld [vmem:[%s0 + $0x168] sm:$0xff]
    %v87 = vld [vmem:[%s0 + $0x170] sm:$0xff]
    %v88 = vld [vmem:[%s0 + $0x178] sm:$0xff]
    %v89 = vld [vmem:[%s0 + $0x180] sm:$0xff]
    %v90 = vld [vmem:[%s0 + $0x188] sm:$0xff]
    %v91 = vld [vmem:[%s0 + $0x190] sm:$0xff]
    %v92 = vld [vmem:[%s0 + $0x198] sm:$0xff]
    %v93 = vld [vmem:[%s0 + $0x1a0] sm:$0xff]
    %v94 = vld [vmem:[%s0 + $0x1a8] sm:$0xff]
    %v95 = vld [vmem:[%s0 + $0x1b0] sm:$0xff]
    %v96 = vld [vmem:[%s0 + $0x1b8] sm:$0xff]
    %v97 = vld [vmem:[%s0 + $0x1c0] sm:$0xff]
    %v98 = vld [vmem:[%s0 + $0x1c8] sm:$0xff]
    %v99 = vld [vmem:[%s0 + $0x1d0] sm:$0xff]
    %v100 = vld [vmem:[%s0 + $0x1d8] sm:$0xff]
    %v101 = vld [vmem:[%s0 + $0x1e0] sm:$0xff]
    %v102 = vld [vmem:[%s0 + $0x1e8] sm:$0xff]
    %v103 = vld [vmem:[%s0 + $0x1f0] sm:$0xff]
    %v104 = vld [vmem:[%s0 + $0x1f8] sm:$0xff]
    %v105 = vmax.f32 %v41, %v57
    %v106 = vmax.f32 %v42, %v58
    %v107 = vmax.f32 %v43, %v59
    %v108 = vmax.f32 %v44, %v60
    %v109 = vmax.f32 %v45, %v61
    %v110 = vmax.f32 %v46, %v62
    %v111 = vmax.f32 %v47, %v63
    %v112 = vmax.f32 %v48, %v64
    %v113 = vmax.f32 %v49, %v65
    %v114 = vmax.f32 %v50, %v66
    %v115 = vmax.f32 %v51, %v67
    %v116 = vmax.f32 %v52, %v68
    %v117 = vmax.f32 %v53, %v69
    %v118 = vmax.f32 %v54, %v70
    %v119 = vmax.f32 %v55, %v71
    %v120 = vmax.f32 %v56, %v72
    %v121 = vmax.f32 %v73, %v89
    %v122 = vmax.f32 %v74, %v90
    %v123 = vmax.f32 %v75, %v91
    %v124 = vmax.f32 %v76, %v92
    %v125 = vmax.f32 %v77, %v93
    %v126 = vmax.f32 %v78, %v94
    %v127 = vmax.f32 %v79, %v95
    %v128 = vmax.f32 %v80, %v96
    %v129 = vmax.f32 %v81, %v97
    %v130 = vmax.f32 %v82, %v98
    %v131 = vmax.f32 %v83, %v99
    %v132 = vmax.f32 %v84, %v100
    %v133 = vmax.f32 %v85, %v101
    %v134 = vmax.f32 %v86, %v102
    %v135 = vmax.f32 %v87, %v103
    %v136 = vmax.f32 %v88, %v104
    %v137 = vmax.f32 %v105, %v121
    %v138 = vmax.f32 %v106, %v122
    %v139 = vmax.f32 %v107, %v123
    %v140 = vmax.f32 %v108, %v124
    %v141 = vmax.f32 %v109, %v125
    %v142 = vmax.f32 %v110, %v126
    %v143 = vmax.f32 %v111, %v127
    %v144 = vmax.f32 %v112, %v128
    %v145 = vmax.f32 %v113, %v129
    %v146 = vmax.f32 %v114, %v130
    %v147 = vmax.f32 %v115, %v131
    %v148 = vmax.f32 %v116, %v132
    %v149 = vmax.f32 %v117, %v133
    %v150 = vmax.f32 %v118, %v134
    %v151 = vmax.f32 %v119, %v135
    %v152 = vmax.f32 %v120, %v136
    %v170 = vrot.slane 0.0, 7
    %v171 = vrot.slane %v137, 7
    %v172 = vrot.slane %v138, 7
    %v173 = vrot.slane %v139, 7
    %v174 = vrot.slane %v140, 7
    %v175 = vrot.slane %v141, 7
    %v176 = vrot.slane %v142, 7
    %v177 = vrot.slane %v143, 7
    %v178 = vrot.slane %v144, 7
    %v179 = vrot.slane %v145, 7
    %v180 = vrot.slane %v146, 7
    %v181 = vrot.slane %v147, 7
    %v182 = vrot.slane %v148, 7
    %v183 = vrot.slane %v149, 7
    %v184 = vrot.slane %v150, 7
    %v185 = vrot.slane %v151, 7
    %v186 = vrot.slane %v152, 7
    %vm204 = vcmask 1040384
    %v205 = vsel %vm204, 0.0, %v170
    %v206 = vsel %vm204, 0.0, %v171
    %v207 = vsel %vm204, 0.0, %v172
    %v208 = vsel %vm204, 0.0, %v173
    %v209 = vsel %vm204, 0.0, %v174
    %v210 = vsel %vm204, 0.0, %v175
    %v211 = vsel %vm204, 0.0, %v176
    %v212 = vsel %vm204, 0.0, %v177
    %v213 = vsel %vm204, 0.0, %v178
    %v214 = vsel %vm204, 0.0, %v179
    %v215 = vsel %vm204, 0.0, %v180
    %v216 = vsel %vm204, 0.0, %v181
    %v217 = vsel %vm204, 0.0, %v182
    %v218 = vsel %vm204, 0.0, %v183
    %v219 = vsel %vm204, 0.0, %v184
    %v220 = vsel %vm204, 0.0, %v185
    %v221 = vsel %vm204, 0.0, %v186
    %v222 = vsel %vm204, %v170, 0.0
    %v223 = vsel %vm204, %v171, 0.0
    %v224 = vsel %vm204, %v172, 0.0
    %v225 = vsel %vm204, %v173, 0.0
    %v226 = vsel %vm204, %v174, 0.0
    %v227 = vsel %vm204, %v175, 0.0
    %v228 = vsel %vm204, %v176, 0.0
    %v229 = vsel %vm204, %v177, 0.0
    %v230 = vsel %vm204, %v178, 0.0
    %v231 = vsel %vm204, %v179, 0.0
    %v232 = vsel %vm204, %v180, 0.0
    %v233 = vsel %vm204, %v181, 0.0
    %v234 = vsel %vm204, %v182, 0.0
    %v235 = vsel %vm204, %v183, 0.0
    %v236 = vsel %vm204, %v184, 0.0
    %v237 = vsel %vm204, %v185, 0.0
    %v238 = vsel %vm204, %v186, 0.0
    %vm269 = vcmask 1046528
    %v270 = vrot.slane %v205, 1
    %v271 = vrot.slane %v222, 1
    %v272 = vsel %vm269, %v270, %v271
    %v273 = vrot.slane %v206, 1
    %v274 = vrot.slane %v223, 1
    %v275 = vsel %vm269, %v273, %v274
    %v276 = vrot.slane %v207, 1
    %v277 = vrot.slane %v224, 1
    %v278 = vsel %vm269, %v276, %v277
    %v279 = vrot.slane %v208, 1
    %v280 = vrot.slane %v225, 1
    %v281 = vsel %vm269, %v279, %v280
    %v282 = vrot.slane %v209, 1
    %v283 = vrot.slane %v226, 1
    %v284 = vsel %vm269, %v282, %v283
    %v285 = vrot.slane %v210, 1
    %v286 = vrot.slane %v227, 1
    %v287 = vsel %vm269, %v285, %v286
    %v288 = vrot.slane %v211, 1
    %v289 = vrot.slane %v228, 1
    %v290 = vsel %vm269, %v288, %v289
    %v291 = vrot.slane %v212, 1
    %v292 = vrot.slane %v229, 1
    %v293 = vsel %vm269, %v291, %v292
    %v294 = vrot.slane %v214, 1
    %v295 = vrot.slane %v231, 1
    %v296 = vsel %vm269, %v294, %v295
    %v297 = vrot.slane %v215, 1
    %v298 = vrot.slane %v232, 1
    %v299 = vsel %vm269, %v297, %v298
    %v300 = vrot.slane %v216, 1
    %v301 = vrot.slane %v233, 1
    %v302 = vsel %vm269, %v300, %v301
    %v303 = vrot.slane %v217, 1
    %v304 = vrot.slane %v234, 1
    %v305 = vsel %vm269, %v303, %v304
    %v306 = vrot.slane %v218, 1
    %v307 = vrot.slane %v235, 1
    %v308 = vsel %vm269, %v306, %v307
    %v309 = vrot.slane %v219, 1
    %v310 = vrot.slane %v236, 1
    %v311 = vsel %vm269, %v309, %v310
    %v312 = vrot.slane %v220, 1
    %v313 = vrot.slane %v237, 1
    %v314 = vsel %vm269, %v312, %v313
    %vm315 = vcmask 1045504
    %v316 = vrot.slane %v205, 2
    %v317 = vrot.slane %v222, 2
    %v318 = vsel %vm315, %v316, %v317
    %v319 = vrot.slane %v206, 2
    %v320 = vrot.slane %v223, 2
    %v321 = vsel %vm315, %v319, %v320
    %v322 = vrot.slane %v207, 2
    %v323 = vrot.slane %v224, 2
    %v324 = vsel %vm315, %v322, %v323
    %v325 = vrot.slane %v208, 2
    %v326 = vrot.slane %v225, 2
    %v327 = vsel %vm315, %v325, %v326
    %v328 = vrot.slane %v209, 2
    %v329 = vrot.slane %v226, 2
    %v330 = vsel %vm315, %v328, %v329
    %v331 = vrot.slane %v210, 2
    %v332 = vrot.slane %v227, 2
    %v333 = vsel %vm315, %v331, %v332
    %v334 = vrot.slane %v211, 2
    %v335 = vrot.slane %v228, 2
    %v336 = vsel %vm315, %v334, %v335
    %v337 = vrot.slane %v212, 2
    %v338 = vrot.slane %v229, 2
    %v339 = vsel %vm315, %v337, %v338
    %v340 = vrot.slane %v214, 2
    %v341 = vrot.slane %v231, 2
    %v342 = vsel %vm315, %v340, %v341
    %v343 = vrot.slane %v215, 2
    %v344 = vrot.slane %v232, 2
    %v345 = vsel %vm315, %v343, %v344
    %v346 = vrot.slane %v216, 2
    %v347 = vrot.slane %v233, 2
    %v348 = vsel %vm315, %v346, %v347
    %v349 = vrot.slane %v217, 2
    %v350 = vrot.slane %v234, 2
    %v351 = vsel %vm315, %v349, %v350
    %v352 = vrot.slane %v218, 2
    %v353 = vrot.slane %v235, 2
    %v354 = vsel %vm315, %v352, %v353
    %v355 = vrot.slane %v219, 2
    %v356 = vrot.slane %v236, 2
    %v357 = vsel %vm315, %v355, %v356
    %v358 = vrot.slane %v220, 2
    %v359 = vrot.slane %v237, 2
    %v360 = vsel %vm315, %v358, %v359
    %v365 = vrot.slane %v213, 1
    %v366 = vrot.slane %v230, 1
    %v367 = vsel %vm269, %v365, %v366
    %v368 = vrot.slane %v221, 1
    %v369 = vrot.slane %v238, 1
    %v370 = vsel %vm269, %v368, %v369
    %v371 = vrot.slane %v213, 2
    %v372 = vrot.slane %v230, 2
    %v373 = vsel %vm315, %v371, %v372
    %v374 = vrot.slane %v221, 2
    %v375 = vrot.slane %v238, 2
    %v376 = vsel %vm315, %v374, %v375
    %377 = vrot.lane.b32.xlu0 %v272, 4
    %v378 = vpop.permute.xlu0 %377
    %379 = vrot.lane.b32.xlu0 %v275, 4
    %v380 = vpop.permute.xlu0 %379
    %381 = vrot.lane.b32.xlu0 %v278, 4
    %v382 = vpop.permute.xlu0 %381
    %383 = vrot.lane.b32.xlu0 %v281, 4
    %v384 = vpop.permute.xlu0 %383
    %385 = vrot.lane.b32.xlu0 %v284, 4
    %v386 = vpop.permute.xlu0 %385
    %387 = vrot.lane.b32.xlu0 %v287, 4
    %v388 = vpop.permute.xlu0 %387
    %389 = vrot.lane.b32.xlu0 %v290, 4
    %v390 = vpop.permute.xlu0 %389
    %391 = vrot.lane.b32.xlu0 %v293, 4
    %v392 = vpop.permute.xlu0 %391
    %393 = vrot.lane.b32.xlu0 %v296, 4
    %v394 = vpop.permute.xlu0 %393
    %395 = vrot.lane.b32.xlu0 %v299, 4
    %v396 = vpop.permute.xlu0 %395
    %397 = vrot.lane.b32.xlu0 %v302, 4
    %v398 = vpop.permute.xlu0 %397
    %399 = vrot.lane.b32.xlu0 %v305, 4
    %v400 = vpop.permute.xlu0 %399
    %401 = vrot.lane.b32.xlu0 %v308, 4
    %v402 = vpop.permute.xlu0 %401
    %403 = vrot.lane.b32.xlu0 %v311, 4
    %v404 = vpop.permute.xlu0 %403
    %405 = vrot.lane.b32.xlu0 %v314, 4
    %v406 = vpop.permute.xlu0 %405
    %422 = vrot.lane.b32.xlu0 %v318, 8
    %v423 = vpop.permute.xlu0 %422
    %424 = vrot.lane.b32.xlu0 %v321, 8
    %v425 = vpop.permute.xlu0 %424
    %426 = vrot.lane.b32.xlu0 %v324, 8
    %v427 = vpop.permute.xlu0 %426
    %428 = vrot.lane.b32.xlu0 %v327, 8
    %v429 = vpop.permute.xlu0 %428
    %430 = vrot.lane.b32.xlu0 %v330, 8
    %v431 = vpop.permute.xlu0 %430
    %432 = vrot.lane.b32.xlu0 %v333, 8
    %v433 = vpop.permute.xlu0 %432
    %434 = vrot.lane.b32.xlu0 %v336, 8
    %v435 = vpop.permute.xlu0 %434
    %436 = vrot.lane.b32.xlu0 %v339, 8
    %v437 = vpop.permute.xlu0 %436
    %438 = vrot.lane.b32.xlu0 %v342, 8
    %v439 = vpop.permute.xlu0 %438
    %440 = vrot.lane.b32.xlu0 %v345, 8
    %v441 = vpop.permute.xlu0 %440
    %442 = vrot.lane.b32.xlu0 %v348, 8
    %v443 = vpop.permute.xlu0 %442
    %444 = vrot.lane.b32.xlu0 %v351, 8
    %v445 = vpop.permute.xlu0 %444
    %446 = vrot.lane.b32.xlu0 %v354, 8
    %v447 = vpop.permute.xlu0 %446
    %448 = vrot.lane.b32.xlu0 %v357, 8
    %v449 = vpop.permute.xlu0 %448
    %450 = vrot.lane.b32.xlu0 %v360, 8
    %v451 = vpop.permute.xlu0 %450
    %467 = vrot.lane.b32.xlu0 %v206, 12
    %v468 = vpop.permute.xlu0 %467
    %469 = vrot.lane.b32.xlu0 %v207, 12
    %v470 = vpop.permute.xlu0 %469
    %471 = vrot.lane.b32.xlu0 %v208, 12
    %v472 = vpop.permute.xlu0 %471
    %473 = vrot.lane.b32.xlu0 %v209, 12
    %v474 = vpop.permute.xlu0 %473
    %475 = vrot.lane.b32.xlu0 %v210, 12
    %v476 = vpop.permute.xlu0 %475
    %477 = vrot.lane.b32.xlu0 %v211, 12
    %v478 = vpop.permute.xlu0 %477
    %479 = vrot.lane.b32.xlu0 %v212, 12
    %v480 = vpop.permute.xlu0 %479
    %481 = vrot.lane.b32.xlu0 %v213, 12
    %v482 = vpop.permute.xlu0 %481
    %483 = vrot.lane.b32.xlu0 %v214, 12
    %v484 = vpop.permute.xlu0 %483
    %485 = vrot.lane.b32.xlu0 %v215, 12
    %v486 = vpop.permute.xlu0 %485
    %487 = vrot.lane.b32.xlu0 %v216, 12
    %v488 = vpop.permute.xlu0 %487
    %489 = vrot.lane.b32.xlu0 %v217, 12
    %v490 = vpop.permute.xlu0 %489
    %491 = vrot.lane.b32.xlu0 %v218, 12
    %v492 = vpop.permute.xlu0 %491
    %493 = vrot.lane.b32.xlu0 %v219, 12
    %v494 = vpop.permute.xlu0 %493
    %495 = vrot.lane.b32.xlu0 %v220, 12
    %v496 = vpop.permute.xlu0 %495
    %497 = vrot.lane.b32.xlu0 %v221, 12
    %v498 = vpop.permute.xlu0 %497
    %515 = vrot.lane.b32.xlu0 %v275, 16
    %v516 = vpop.permute.xlu0 %515
    %517 = vrot.lane.b32.xlu0 %v278, 16
    %v518 = vpop.permute.xlu0 %517
    %519 = vrot.lane.b32.xlu0 %v281, 16
    %v520 = vpop.permute.xlu0 %519
    %521 = vrot.lane.b32.xlu0 %v284, 16
    %v522 = vpop.permute.xlu0 %521
    %523 = vrot.lane.b32.xlu0 %v287, 16
    %v524 = vpop.permute.xlu0 %523
    %525 = vrot.lane.b32.xlu0 %v290, 16
    %v526 = vpop.permute.xlu0 %525
    %527 = vrot.lane.b32.xlu0 %v293, 16
    %v528 = vpop.permute.xlu0 %527
    %529 = vrot.lane.b32.xlu0 %v367, 16
    %v530 = vpop.permute.xlu0 %529
    %531 = vrot.lane.b32.xlu0 %v296, 16
    %v532 = vpop.permute.xlu0 %531
    %533 = vrot.lane.b32.xlu0 %v299, 16
    %v534 = vpop.permute.xlu0 %533
    %535 = vrot.lane.b32.xlu0 %v302, 16
    %v536 = vpop.permute.xlu0 %535
    %537 = vrot.lane.b32.xlu0 %v305, 16
    %v538 = vpop.permute.xlu0 %537
    %539 = vrot.lane.b32.xlu0 %v308, 16
    %v540 = vpop.permute.xlu0 %539
    %541 = vrot.lane.b32.xlu0 %v311, 16
    %v542 = vpop.permute.xlu0 %541
    %543 = vrot.lane.b32.xlu0 %v314, 16
    %v544 = vpop.permute.xlu0 %543
    %545 = vrot.lane.b32.xlu0 %v370, 16
    %v546 = vpop.permute.xlu0 %545
    %563 = vrot.lane.b32.xlu0 %v321, 20
    %v564 = vpop.permute.xlu0 %563
    %565 = vrot.lane.b32.xlu0 %v324, 20
    %v566 = vpop.permute.xlu0 %565
    %567 = vrot.lane.b32.xlu0 %v327, 20
    %v568 = vpop.permute.xlu0 %567
    %569 = vrot.lane.b32.xlu0 %v330, 20
    %v570 = vpop.permute.xlu0 %569
    %571 = vrot.lane.b32.xlu0 %v333, 20
    %v572 = vpop.permute.xlu0 %571
    %573 = vrot.lane.b32.xlu0 %v336, 20
    %v574 = vpop.permute.xlu0 %573
    %575 = vrot.lane.b32.xlu0 %v339, 20
    %v576 = vpop.permute.xlu0 %575
    %577 = vrot.lane.b32.xlu0 %v373, 20
    %v578 = vpop.permute.xlu0 %577
    %579 = vrot.lane.b32.xlu0 %v342, 20
    %v580 = vpop.permute.xlu0 %579
    %581 = vrot.lane.b32.xlu0 %v345, 20
    %v582 = vpop.permute.xlu0 %581
    %583 = vrot.lane.b32.xlu0 %v348, 20
    %v584 = vpop.permute.xlu0 %583
    %585 = vrot.lane.b32.xlu0 %v351, 20
    %v586 = vpop.permute.xlu0 %585
    %587 = vrot.lane.b32.xlu0 %v354, 20
    %v588 = vpop.permute.xlu0 %587
    %589 = vrot.lane.b32.xlu0 %v357, 20
    %v590 = vpop.permute.xlu0 %589
    %591 = vrot.lane.b32.xlu0 %v360, 20
    %v592 = vpop.permute.xlu0 %591
    %593 = vrot.lane.b32.xlu0 %v376, 20
    %v594 = vpop.permute.xlu0 %593
    %611 = vrot.lane.b32.xlu0 %v207, 24
    %v612 = vpop.permute.xlu0 %611
    %613 = vrot.lane.b32.xlu0 %v208, 24
    %v614 = vpop.permute.xlu0 %613
    %615 = vrot.lane.b32.xlu0 %v209, 24
    %v616 = vpop.permute.xlu0 %615
    %617 = vrot.lane.b32.xlu0 %v210, 24
    %v618 = vpop.permute.xlu0 %617
    %619 = vrot.lane.b32.xlu0 %v211, 24
    %v620 = vpop.permute.xlu0 %619
    %621 = vrot.lane.b32.xlu0 %v212, 24
    %v622 = vpop.permute.xlu0 %621
    %623 = vrot.lane.b32.xlu0 %v213, 24
    %v624 = vpop.permute.xlu0 %623
    %625 = vrot.lane.b32.xlu0 %v205, 24
    %v626 = vpop.permute.xlu0 %625
    %627 = vrot.lane.b32.xlu0 %v215, 24
    %v628 = vpop.permute.xlu0 %627
    %629 = vrot.lane.b32.xlu0 %v216, 24
    %v630 = vpop.permute.xlu0 %629
    %631 = vrot.lane.b32.xlu0 %v217, 24
    %v632 = vpop.permute.xlu0 %631
    %633 = vrot.lane.b32.xlu0 %v218, 24
    %v634 = vpop.permute.xlu0 %633
    %635 = vrot.lane.b32.xlu0 %v219, 24
    %v636 = vpop.permute.xlu0 %635
    %637 = vrot.lane.b32.xlu0 %v220, 24
    %v638 = vpop.permute.xlu0 %637
    %639 = vrot.lane.b32.xlu0 %v221, 24
    %v640 = vpop.permute.xlu0 %639
    %656 = vrot.lane.b32.xlu0 %v278, 28
    %v657 = vpop.permute.xlu0 %656
    %658 = vrot.lane.b32.xlu0 %v281, 28
    %v659 = vpop.permute.xlu0 %658
    %660 = vrot.lane.b32.xlu0 %v284, 28
    %v661 = vpop.permute.xlu0 %660
    %662 = vrot.lane.b32.xlu0 %v287, 28
    %v663 = vpop.permute.xlu0 %662
    %664 = vrot.lane.b32.xlu0 %v290, 28
    %v665 = vpop.permute.xlu0 %664
    %666 = vrot.lane.b32.xlu0 %v293, 28
    %v667 = vpop.permute.xlu0 %666
    %668 = vrot.lane.b32.xlu0 %v367, 28
    %v669 = vpop.permute.xlu0 %668
    %670 = vrot.lane.b32.xlu0 %v272, 28
    %v671 = vpop.permute.xlu0 %670
    %672 = vrot.lane.b32.xlu0 %v299, 28
    %v673 = vpop.permute.xlu0 %672
    %674 = vrot.lane.b32.xlu0 %v302, 28
    %v675 = vpop.permute.xlu0 %674
    %676 = vrot.lane.b32.xlu0 %v305, 28
    %v677 = vpop.permute.xlu0 %676
    %678 = vrot.lane.b32.xlu0 %v308, 28
    %v679 = vpop.permute.xlu0 %678
    %680 = vrot.lane.b32.xlu0 %v311, 28
    %v681 = vpop.permute.xlu0 %680
    %682 = vrot.lane.b32.xlu0 %v314, 28
    %v683 = vpop.permute.xlu0 %682
    %684 = vrot.lane.b32.xlu0 %v370, 28
    %v685 = vpop.permute.xlu0 %684
    %701 = vrot.lane.b32.xlu0 %v324, 32
    %v702 = vpop.permute.xlu0 %701
    %703 = vrot.lane.b32.xlu0 %v327, 32
    %v704 = vpop.permute.xlu0 %703
    %705 = vrot.lane.b32.xlu0 %v330, 32
    %v706 = vpop.permute.xlu0 %705
    %707 = vrot.lane.b32.xlu0 %v333, 32
    %v708 = vpop.permute.xlu0 %707
    %709 = vrot.lane.b32.xlu0 %v336, 32
    %v710 = vpop.permute.xlu0 %709
    %711 = vrot.lane.b32.xlu0 %v339, 32
    %v712 = vpop.permute.xlu0 %711
    %713 = vrot.lane.b32.xlu0 %v373, 32
    %v714 = vpop.permute.xlu0 %713
    %715 = vrot.lane.b32.xlu0 %v318, 32
    %v716 = vpop.permute.xlu0 %715
    %717 = vrot.lane.b32.xlu0 %v345, 32
    %v718 = vpop.permute.xlu0 %717
    %719 = vrot.lane.b32.xlu0 %v348, 32
    %v720 = vpop.permute.xlu0 %719
    %721 = vrot.lane.b32.xlu0 %v351, 32
    %v722 = vpop.permute.xlu0 %721
    %723 = vrot.lane.b32.xlu0 %v354, 32
    %v724 = vpop.permute.xlu0 %723
    %725 = vrot.lane.b32.xlu0 %v357, 32
    %v726 = vpop.permute.xlu0 %725
    %727 = vrot.lane.b32.xlu0 %v360, 32
    %v728 = vpop.permute.xlu0 %727
    %729 = vrot.lane.b32.xlu0 %v376, 32
    %v730 = vpop.permute.xlu0 %729
    %vm746 = vcmask 31744
    %v747 = vsel %vm746, %v205, %v378
    %v748 = vsel %vm746, %v206, %v380
    %v749 = vsel %vm746, %v207, %v382
    %v750 = vsel %vm746, %v208, %v384
    %v751 = vsel %vm746, %v209, %v386
    %v752 = vsel %vm746, %v210, %v388
    %v753 = vsel %vm746, %v211, %v390
    %v754 = vsel %vm746, %v212, %v392
    %v755 = vsel %vm746, %v214, %v394
    %v756 = vsel %vm746, %v215, %v396
    %v757 = vsel %vm746, %v216, %v398
    %v758 = vsel %vm746, %v217, %v400
    %v759 = vsel %vm746, %v218, %v402
    %v760 = vsel %vm746, %v219, %v404
    %v761 = vsel %vm746, %v220, %v406
    %vm762 = vcmask 64512
    %v763 = vsel %vm762, %v747, %v423
    %v764 = vsel %vm762, %v748, %v425
    %v765 = vsel %vm762, %v749, %v427
    %v766 = vsel %vm762, %v750, %v429
    %v767 = vsel %vm762, %v751, %v431
    %v768 = vsel %vm762, %v752, %v433
    %v769 = vsel %vm762, %v753, %v435
    %v770 = vsel %vm762, %v754, %v437
    %v771 = vsel %vm762, %v755, %v439
    %v772 = vsel %vm762, %v756, %v441
    %v773 = vsel %vm762, %v757, %v443
    %v774 = vsel %vm762, %v758, %v445
    %v775 = vsel %vm762, %v759, %v447
    %v776 = vsel %vm762, %v760, %v449
    %v777 = vsel %vm762, %v761, %v451
    %vm778 = vcmask 97280
    %v779 = vsel %vm778, %v763, %v468
    %v780 = vsel %vm778, %v764, %v470
    %v781 = vsel %vm778, %v765, %v472
    %v782 = vsel %vm778, %v766, %v474
    %v783 = vsel %vm778, %v767, %v476
    %v784 = vsel %vm778, %v768, %v478
    %v785 = vsel %vm778, %v769, %v480
    %v786 = vsel %vm778, %v770, %v482
    %v787 = vsel %vm778, %v763, %v484
    %v788 = vsel %vm778, %v771, %v486
    %v789 = vsel %vm778, %v772, %v488
    %v790 = vsel %vm778, %v773, %v490
    %v791 = vsel %vm778, %v774, %v492
    %v792 = vsel %vm778, %v775, %v494
    %v793 = vsel %vm778, %v776, %v496
    %v794 = vsel %vm778, %v777, %v498
    %vm795 = vcmask 130048
    %v796 = vsel %vm795, %v779, %v516
    %v797 = vsel %vm795, %v780, %v518
    %v798 = vsel %vm795, %v781, %v520
    %v799 = vsel %vm795, %v782, %v522
    %v800 = vsel %vm795, %v783, %v524
    %v801 = vsel %vm795, %v784, %v526
    %v802 = vsel %vm795, %v785, %v528
    %v803 = vsel %vm795, %v786, %v530
    %v804 = vsel %vm795, %v787, %v532
    %v805 = vsel %vm795, %v788, %v534
    %v806 = vsel %vm795, %v789, %v536
    %v807 = vsel %vm795, %v790, %v538
    %v808 = vsel %vm795, %v791, %v540
    %v809 = vsel %vm795, %v792, %v542
    %v810 = vsel %vm795, %v793, %v544
    %v811 = vsel %vm795, %v794, %v546
    %vm812 = vcmask 162816
    %v813 = vsel %vm812, %v796, %v564
    %v814 = vsel %vm812, %v797, %v566
    %v815 = vsel %vm812, %v798, %v568
    %v816 = vsel %vm812, %v799, %v570
    %v817 = vsel %vm812, %v800, %v572
    %v818 = vsel %vm812, %v801, %v574
    %v819 = vsel %vm812, %v802, %v576
    %v820 = vsel %vm812, %v803, %v578
    %v821 = vsel %vm812, %v804, %v580
    %v822 = vsel %vm812, %v805, %v582
    %v823 = vsel %vm812, %v806, %v584
    %v824 = vsel %vm812, %v807, %v586
    %v825 = vsel %vm812, %v808, %v588
    %v826 = vsel %vm812, %v809, %v590
    %v827 = vsel %vm812, %v810, %v592
    %v828 = vsel %vm812, %v811, %v594
    %vm829 = vcmask 195584
    %v830 = vsel %vm829, %v813, %v612
    %v831 = vsel %vm829, %v814, %v614
    %v832 = vsel %vm829, %v815, %v616
    %v833 = vsel %vm829, %v816, %v618
    %v834 = vsel %vm829, %v817, %v620
    %v835 = vsel %vm829, %v818, %v622
    %v836 = vsel %vm829, %v819, %v624
    %v837 = vsel %vm829, %v820, %v626
    %v838 = vsel %vm829, %v821, %v628
    %v839 = vsel %vm829, %v822, %v630
    %v840 = vsel %vm829, %v823, %v632
    %v841 = vsel %vm829, %v824, %v634
    %v842 = vsel %vm829, %v825, %v636
    %v843 = vsel %vm829, %v826, %v638
    %v844 = vsel %vm829, %v827, %v640
    %v845 = vsel %vm829, %v828, %v626
    %vm846 = vcmask 228352
    %v847 = vsel %vm846, %v830, %v657
    %v848 = vsel %vm846, %v831, %v659
    %v849 = vsel %vm846, %v832, %v661
    %v850 = vsel %vm846, %v833, %v663
    %v851 = vsel %vm846, %v834, %v665
    %v852 = vsel %vm846, %v835, %v667
    %v853 = vsel %vm846, %v836, %v669
    %v854 = vsel %vm846, %v837, %v671
    %v855 = vsel %vm846, %v838, %v673
    %v856 = vsel %vm846, %v839, %v675
    %v857 = vsel %vm846, %v840, %v677
    %v858 = vsel %vm846, %v841, %v679
    %v859 = vsel %vm846, %v842, %v681
    %v860 = vsel %vm846, %v843, %v683
    %v861 = vsel %vm846, %v844, %v685
    %v862 = vsel %vm846, %v845, %v671
    %vm863 = vcmask 261120
    %v864 = vsel %vm863, %v847, %v702
    %v865 = vsel %vm863, %v848, %v704
    %v866 = vsel %vm863, %v849, %v706
    %v867 = vsel %vm863, %v850, %v708
    %v868 = vsel %vm863, %v851, %v710
    %v869 = vsel %vm863, %v852, %v712
    %v870 = vsel %vm863, %v853, %v714
    %v871 = vsel %vm863, %v854, %v716
    %v872 = vsel %vm863, %v855, %v718
    %v873 = vsel %vm863, %v856, %v720
    %v874 = vsel %vm863, %v857, %v722
    %v875 = vsel %vm863, %v858, %v724
    %v876 = vsel %vm863, %v859, %v726
    %v877 = vsel %vm863, %v860, %v728
    %v878 = vsel %vm863, %v861, %v730
    %v879 = vsel %vm863, %v862, %v716
    %v880 = vld [vmem:[%s1] sm:$0xff]
    %v881 = vld [vmem:[%s1 + $0x8] sm:$0xff]
    %v882 = vld [vmem:[%s1 + $0x10] sm:$0xff]
    %v883 = vld [vmem:[%s1 + $0x18] sm:$0xff]
    %v884 = vld [vmem:[%s1 + $0x20] sm:$0xf]
    %vm885 = vcmask 293888
    %v887 = vsel %vm885, %v864, 0
    %v890 = vsel %vm885, %v865, 0
    %v893 = vsel %vm885, %v866, 0
    %v896 = vsel %vm885, %v867, 0
    %v899 = vsel %vm885, %v868, 0
    %v902 = vsel %vm885, %v869, 0
    %v905 = vsel %vm885, %v870, 0
    %v908 = vsel %vm885, %v871, 0
    %v911 = vsel %vm885, %v872, 0
    %v914 = vsel %vm885, %v873, 0
    %v917 = vsel %vm885, %v874, 0
    %v920 = vsel %vm885, %v875, 0
    %v923 = vsel %vm885, %v876, 0
    %v926 = vsel %vm885, %v877, 0
    %v929 = vsel %vm885, %v878, 0
    %v932 = vsel %vm885, %v879, 0
    %vm934 = vcmask 1043456
    %v936 = vsel %vm934, %v884, 0
    %938 = vmatprep.subr.mxu0 0.0
    %939 = vmatpush1.msra.mxu0 %v880
    %940 = vmatprep.subr.mxu0 0.0
    %941 = vmatpush1.msra.mxu0 %v881
    %942 = vmatprep.subr.mxu0 0.0
    %943 = vmatpush1.msra.mxu0 %v882
    %944 = vmatprep.subr.mxu0 0.0
    %945 = vmatpush1.msra.mxu0 %v883
    %946 = vmatprep.subr.mxu0 0.0
    %947 = vmatpush1.msra.mxu0 %v936
    %948 = vmatprep.subr.mxu0 0.0
    %949 = vmatpush1.msra.mxu0 0.0
    %950 = vmatprep.subr.mxu0 0.0
    %951 = vmatpush1.msra.mxu0 0.0
    %952 = vmatprep.subr.mxu0 0.0
    %953 = vmatpush1.msra.mxu0 0.0
    %954 = vmatprep.subr.mxu0 0.0
    %955 = vmatpush1.msra.mxu0 0.0
    %956 = vmatprep.subr.mxu0 0.0
    %957 = vmatpush1.msra.mxu0 0.0
    %958 = vmatprep.subr.mxu0 0.0
    %959 = vmatpush1.msra.mxu0 0.0
    %960 = vmatprep.subr.mxu0 0.0
    %961 = vmatpush1.msra.mxu0 0.0
    %962 = vmatprep.subr.mxu0 0.0
    %963 = vmatpush1.msra.mxu0 0.0
    %964 = vmatprep.subr.mxu0 0.0
    %965 = vmatpush1.msra.mxu0 0.0
    %966 = vmatprep.subr.mxu0 0.0
    %967 = vmatpush1.msra.mxu0 0.0
    %968 = vmatprep.subr.mxu0 0.0
    %969 = vmatpush1.msra.mxu0 0.0
    %970 = vmatprep.subr.mxu0 0.0
    %971 = vmatpush1.msra.mxu0 0.0
    %972 = vmatprep.subr.mxu0 0.0
    %973 = vmatpush1.msra.mxu0 0.0
    %974 = vmatprep.subr.mxu0 0.0
    %975 = vmatpush1.msra.mxu0 0.0
    %976 = vmatprep.subr.mxu0 0.0
    %977 = vmatpush1.msra.mxu0 0.0
    %978 = vmatprep.subr.mxu0 0.0
    %979 = vmatpush1.msra.mxu0 0.0
    %980 = vmatprep.subr.mxu0 0.0
    %981 = vmatpush1.msra.mxu0 0.0
    %982 = vmatprep.subr.mxu0 0.0
    %983 = vmatpush1.msra.mxu0 0.0
    %984 = vmatprep.subr.mxu0 0.0
    %985 = vmatpush1.msra.mxu0 0.0
    %986 = vmatprep.subr.mxu0 0.0
    %987 = vmatpush1.msra.mxu0 0.0
    %988 = vmatprep.subr.mxu0 0.0
    %989 = vmatpush1.msra.mxu0 0.0
    %990 = vmatprep.subr.mxu0 0.0
    %991 = vmatpush1.msra.mxu0 0.0
    %992 = vmatprep.subr.mxu0 0.0
    %993 = vmatpush1.msra.mxu0 0.0
    %994 = vmatprep.subr.mxu0 0.0
    %995 = vmatpush1.msra.mxu0 0.0
    %996 = vmatprep.subr.mxu0 0.0
    %997 = vmatpush1.msra.mxu0 0.0
    %998 = vmatprep.subr.mxu0 0.0
    %999 = vmatpush1.msra.mxu0 0.0
    %1000 = vmatprep.subr.mxu0 0.0
    %1001 = vmatpush1.msra.mxu0 0.0
    %1002 = vmatprep.mubr.f32.mxu0 0.0
    %1003 = vmatmul.mubr.f32.gmra.mrb[0].mxu0 %v887
    %v1004 = vpop.f32.mrb[0].mxu0
    %v1005 = vadd.f32 0.0, %v1004
    %v1006 = vpop.f32.mrb[0].mxu0
    %1007 = vmatprep.mubr.f32.mxu0 0.0
    %1008 = vmatmul.mubr.f32.gmra.mrb[0].mxu0 %v890
    %v1009 = vpop.f32.mrb[0].mxu0
    %v1010 = vadd.f32 0.0, %v1009
    %v1011 = vpop.f32.mrb[0].mxu0
    %1012 = vmatprep.mubr.f32.mxu0 0.0
    %1013 = vmatmul.mubr.f32.gmra.mrb[0].mxu0 %v893
    %v1014 = vpop.f32.mrb[0].mxu0
    %v1015 = vadd.f32 0.0, %v1014
    %v1016 = vpop.f32.mrb[0].mxu0
    %1017 = vmatprep.mubr.f32.mxu0 0.0
    %1018 = vmatmul.mubr.f32.gmra.mrb[0].mxu0 %v896
    %v1019 = vpop.f32.mrb[0].mxu0
    %v1020 = vadd.f32 0.0, %v1019
    %v1021 = vpop.f32.mrb[0].mxu0
    %1022 = vmatprep.mubr.f32.mxu0 0.0
    %1023 = vmatmul.mubr.f32.gmra.mrb[0].mxu0 %v899
    %v1024 = vpop.f32.mrb[0].mxu0
    %v1025 = vadd.f32 0.0, %v1024
    %v1026 = vpop.f32.mrb[0].mxu0
    %1027 = vmatprep.mubr.f32.mxu0 0.0
    %1028 = vmatmul.mubr.f32.gmra.mrb[0].mxu0 %v902
    %v1029 = vpop.f32.mrb[0].mxu0
    %v1030 = vadd.f32 0.0, %v1029
    %v1031 = vpop.f32.mrb[0].mxu0
    %1032 = vmatprep.mubr.f32.mxu0 0.0
    %1033 = vmatmul.mubr.f32.gmra.mrb[0].mxu0 %v905
    %v1034 = vpop.f32.mrb[0].mxu0
    %v1035 = vadd.f32 0.0, %v1034
    %v1036 = vpop.f32.mrb[0].mxu0
    %1037 = vmatprep.mubr.f32.mxu0 0.0
    %1038 = vmatmul.mubr.f32.gmra.mrb[0].mxu0 %v908
    %v1039 = vpop.f32.mrb[0].mxu0
    %v1040 = vadd.f32 0.0, %v1039
    %v1041 = vpop.f32.mrb[0].mxu0
    %1042 = vmatprep.mubr.f32.mxu0 0.0
    %1043 = vmatmul.mubr.f32.gmra.mrb[0].mxu0 %v911
    %v1044 = vpop.f32.mrb[0].mxu0
    %v1045 = vadd.f32 0.0, %v1044
    %v1046 = vpop.f32.mrb[0].mxu0
    %1047 = vmatprep.mubr.f32.mxu0 0.0
    %1048 = vmatmul.mubr.f32.gmra.mrb[0].mxu0 %v914
    %v1049 = vpop.f32.mrb[0].mxu0
    %v1050 = vadd.f32 0.0, %v1049
    %v1051 = vpop.f32.mrb[0].mxu0
    %1052 = vmatprep.mubr.f32.mxu0 0.0
    %1053 = vmatmul.mubr.f32.gmra.mrb[0].mxu0 %v917
    %v1054 = vpop.f32.mrb[0].mxu0
    %v1055 = vadd.f32 0.0, %v1054
    %v1056 = vpop.f32.mrb[0].mxu0
    %1057 = vmatprep.mubr.f32.mxu0 0.0
    %1058 = vmatmul.mubr.f32.gmra.mrb[0].mxu0 %v920
    %v1059 = vpop.f32.mrb[0].mxu0
    %v1060 = vadd.f32 0.0, %v1059
    %v1061 = vpop.f32.mrb[0].mxu0
    %1062 = vmatprep.mubr.f32.mxu0 0.0
    %1063 = vmatmul.mubr.f32.gmra.mrb[0].mxu0 %v923
    %v1064 = vpop.f32.mrb[0].mxu0
    %v1065 = vadd.f32 0.0, %v1064
    %v1066 = vpop.f32.mrb[0].mxu0
    %1067 = vmatprep.mubr.f32.mxu0 0.0
    %1068 = vmatmul.mubr.f32.gmra.mrb[0].mxu0 %v926
    %v1069 = vpop.f32.mrb[0].mxu0
    %v1070 = vadd.f32 0.0, %v1069
    %v1071 = vpop.f32.mrb[0].mxu0
    %1072 = vmatprep.mubr.f32.mxu0 0.0
    %1073 = vmatmul.mubr.f32.gmra.mrb[0].mxu0 %v929
    %v1074 = vpop.f32.mrb[0].mxu0
    %v1075 = vadd.f32 0.0, %v1074
    %v1076 = vpop.f32.mrb[0].mxu0
    %1077 = vmatprep.mubr.f32.mxu0 0.0
    %1078 = vmatmul.mubr.f32.gmra.mrb[0].mxu0 %v932
    %v1079 = vpop.f32.mrb[0].mxu0
    %v1080 = vadd.f32 0.0, %v1079
    %v1081 = vpop.f32.mrb[0].mxu0
    %1082 = vdwg.mxu0
    %v1083 = vadd.f32 %v1005, %v1010
    %v1084 = vadd.f32 %v1083, %v1015
    %v1085 = vadd.f32 %v1084, %v1020
    %v1086 = vadd.f32 %v1085, %v1025
    %v1087 = vadd.f32 %v1086, %v1030
    %v1088 = vadd.f32 %v1087, %v1035
    %v1089 = vadd.f32 %v1088, %v1040
    %v1090 = vadd.f32 %v1089, %v1045
    %v1091 = vadd.f32 %v1090, %v1050
    %v1092 = vadd.f32 %v1091, %v1055
    %v1093 = vadd.f32 %v1092, %v1060
    %v1094 = vadd.f32 %v1093, %v1065
    %v1095 = vadd.f32 %v1094, %v1070
    %v1096 = vadd.f32 %v1095, %v1075
    %v1097 = vadd.f32 %v1096, %v1080
    %v1098 = vrot.slane %v1097, 4
    %v1099 = vadd.f32 %v1097, %v1098
    %v1100 = vrot.slane %v1099, 2
    %v1101 = vadd.f32 %v1099, %v1100
    %v1102 = vrot.slane %v1101, 1
    %v1103 = vadd.f32 %v1101, %v1102
    %v1104 = vmul.f32 %v1103, 0.0078125
    %v1105 = vmul.f32 %v1005, %v1005
    %v1106 = vmul.f32 %v1010, %v1010
    %v1107 = vmul.f32 %v1015, %v1015
    %v1108 = vmul.f32 %v1020, %v1020
    %v1109 = vmul.f32 %v1025, %v1025
    %v1110 = vmul.f32 %v1030, %v1030
    %v1111 = vmul.f32 %v1035, %v1035
    %v1112 = vmul.f32 %v1040, %v1040
    %v1113 = vmul.f32 %v1045, %v1045
    %v1114 = vmul.f32 %v1050, %v1050
    %v1115 = vmul.f32 %v1055, %v1055
    %v1116 = vmul.f32 %v1060, %v1060
    %v1117 = vmul.f32 %v1065, %v1065
    %v1118 = vmul.f32 %v1070, %v1070
    %v1119 = vmul.f32 %v1075, %v1075
    %v1120 = vmul.f32 %v1080, %v1080
    %v1121 = vadd.f32 %v1105, %v1106
    %v1122 = vadd.f32 %v1121, %v1107
    %v1123 = vadd.f32 %v1122, %v1108
    %v1124 = vadd.f32 %v1123, %v1109
    %v1125 = vadd.f32 %v1124, %v1110
    %v1126 = vadd.f32 %v1125, %v1111
    %v1127 = vadd.f32 %v1126, %v1112
    %v1128 = vadd.f32 %v1127, %v1113
    %v1129 = vadd.f32 %v1128, %v1114
    %v1130 = vadd.f32 %v1129, %v1115
    %v1131 = vadd.f32 %v1130, %v1116
    %v1132 = vadd.f32 %v1131, %v1117
    %v1133 = vadd.f32 %v1132, %v1118
    %v1134 = vadd.f32 %v1133, %v1119
    %v1135 = vadd.f32 %v1134, %v1120
    %v1136 = vrot.slane %v1135, 4
    %v1137 = vadd.f32 %v1135, %v1136
    %v1138 = vrot.slane %v1137, 2
    %v1139 = vadd.f32 %v1137, %v1138
    %v1140 = vrot.slane %v1139, 1
    %v1141 = vadd.f32 %v1139, %v1140
    %v1142 = vmul.f32 %v1141, 0.0078125
    %v1143 = vmul.f32 %v1104, %v1104
    %v1144 = vsub.f32 %v1142, %v1143
    %v1145 = vmax.f32 %v1144, 0.0
    %v1146 = vld [vmem:[%s2] sm:$0x1]
    %v1147 = vadd.f32 %v1145, 1e-05
    %v1148 = vrsqrt.pop %v1147
    %v1149 = vmul.f32 %v1146, %v1148
    %v1150 = vld [vmem:[%s3] sm:$0x1]
    %v1151 = vmul.f32 %v1104, %v1149
    %v1152 = vsub.f32 %v1150, %v1151
    %v1154 = vlaneseq
    %v1155 = vshrl.u32 %v1154, 7
    %v1156 = vsub.s32 0, %v1155
    %v1157 = vrot.slane %v1149, %v1156
    %v1159 = vmul.f32 %v1005, %v1157
    %v1160 = vmul.f32 %v1010, %v1157
    %v1161 = vmul.f32 %v1015, %v1157
    %v1162 = vmul.f32 %v1020, %v1157
    %v1163 = vmul.f32 %v1025, %v1157
    %v1164 = vmul.f32 %v1030, %v1157
    %v1165 = vmul.f32 %v1035, %v1157
    %v1166 = vmul.f32 %v1040, %v1157
    %v1167 = vmul.f32 %v1045, %v1157
    %v1168 = vmul.f32 %v1050, %v1157
    %v1169 = vmul.f32 %v1055, %v1157
    %v1170 = vmul.f32 %v1060, %v1157
    %v1171 = vmul.f32 %v1065, %v1157
    %v1172 = vmul.f32 %v1070, %v1157
    %v1173 = vmul.f32 %v1075, %v1157
    %v1174 = vmul.f32 %v1080, %v1157
    %v1176 = vlaneseq
    %v1177 = vshrl.u32 %v1176, 7
    %v1178 = vsub.s32 0, %v1177
    %v1179 = vrot.slane %v1152, %v1178
    %v1181 = vadd.f32 %v1159, %v1179
    %v1182 = vadd.f32 %v1160, %v1179
    %v1183 = vadd.f32 %v1161, %v1179
    %v1184 = vadd.f32 %v1162, %v1179
    %v1185 = vadd.f32 %v1163, %v1179
    %v1186 = vadd.f32 %v1164, %v1179
    %v1187 = vadd.f32 %v1165, %v1179
    %v1188 = vadd.f32 %v1166, %v1179
    %v1189 = vadd.f32 %v1167, %v1179
    %v1190 = vadd.f32 %v1168, %v1179
    %v1191 = vadd.f32 %v1169, %v1179
    %v1192 = vadd.f32 %v1170, %v1179
    %v1193 = vadd.f32 %v1171, %v1179
    %v1194 = vadd.f32 %v1172, %v1179
    %v1195 = vadd.f32 %v1173, %v1179
    %v1196 = vadd.f32 %v1174, %v1179
    %v1197 = vmax.f32 %v1181, 0.0
    %v1198 = vmax.f32 %v1182, 0.0
    %v1199 = vmax.f32 %v1183, 0.0
    %v1200 = vmax.f32 %v1184, 0.0
    %v1201 = vmax.f32 %v1185, 0.0
    %v1202 = vmax.f32 %v1186, 0.0
    %v1203 = vmax.f32 %v1187, 0.0
    %v1204 = vmax.f32 %v1188, 0.0
    %v1205 = vmax.f32 %v1189, 0.0
    %v1206 = vmax.f32 %v1190, 0.0
    %v1207 = vmax.f32 %v1191, 0.0
    %v1208 = vmax.f32 %v1192, 0.0
    %v1209 = vmax.f32 %v1193, 0.0
    %v1210 = vmax.f32 %v1194, 0.0
    %v1211 = vmax.f32 %v1195, 0.0
    %v1212 = vmax.f32 %v1196, 0.0
    %v1229 = vrot.slane %v1197, 7
    %v1230 = vrot.slane %v1198, 7
    %v1231 = vrot.slane %v1199, 7
    %v1232 = vrot.slane %v1200, 7
    %v1233 = vrot.slane %v1201, 7
    %v1234 = vrot.slane %v1202, 7
    %v1235 = vrot.slane %v1203, 7
    %v1236 = vrot.slane %v1204, 7
    %v1237 = vrot.slane %v1205, 7
    %v1238 = vrot.slane %v1206, 7
    %v1239 = vrot.slane %v1207, 7
    %v1240 = vrot.slane %v1208, 7
    %v1241 = vrot.slane %v1209, 7
    %v1242 = vrot.slane %v1210, 7
    %v1243 = vrot.slane %v1211, 7
    %v1244 = vrot.slane %v1212, 7
    %v1261 = vsel %vm204, 0.0, %v1229
    %v1262 = vsel %vm204, 0.0, %v1230
    %v1263 = vsel %vm204, 0.0, %v1231
    %v1264 = vsel %vm204, 0.0, %v1232
    %v1265 = vsel %vm204, 0.0, %v1233
    %v1266 = vsel %vm204, 0.0, %v1234
    %v1267 = vsel %vm204, 0.0, %v1235
    %v1268 = vsel %vm204, 0.0, %v1236
    %v1269 = vsel %vm204, 0.0, %v1237
    %v1270 = vsel %vm204, 0.0, %v1238
    %v1271 = vsel %vm204, 0.0, %v1239
    %v1272 = vsel %vm204, 0.0, %v1240
    %v1273 = vsel %vm204, 0.0, %v1241
    %v1274 = vsel %vm204, 0.0, %v1242
    %v1275 = vsel %vm204, 0.0, %v1243
    %v1276 = vsel %vm204, 0.0, %v1244
    %v1277 = vsel %vm204, %v1229, 0.0
    %v1278 = vsel %vm204, %v1230, 0.0
    %v1279 = vsel %vm204, %v1231, 0.0
    %v1280 = vsel %vm204, %v1232, 0.0
    %v1281 = vsel %vm204, %v1233, 0.0
    %v1282 = vsel %vm204, %v1234, 0.0
    %v1283 = vsel %vm204, %v1235, 0.0
    %v1284 = vsel %vm204, %v1236, 0.0
    %v1285 = vsel %vm204, %v1237, 0.0
    %v1286 = vsel %vm204, %v1238, 0.0
    %v1287 = vsel %vm204, %v1239, 0.0
    %v1288 = vsel %vm204, %v1240, 0.0
    %v1289 = vsel %vm204, %v1241, 0.0
    %v1290 = vsel %vm204, %v1242, 0.0
    %v1291 = vsel %vm204, %v1243, 0.0
    %v1292 = vsel %vm204, %v1244, 0.0
    %v1321 = vrot.slane %v1261, 1
    %v1322 = vrot.slane %v1277, 1
    %v1323 = vsel %vm269, %v1321, %v1322
    %v1324 = vrot.slane %v1262, 1
    %v1325 = vrot.slane %v1278, 1
    %v1326 = vsel %vm269, %v1324, %v1325
    %v1327 = vrot.slane %v1263, 1
    %v1328 = vrot.slane %v1279, 1
    %v1329 = vsel %vm269, %v1327, %v1328
    %v1330 = vrot.slane %v1264, 1
    %v1331 = vrot.slane %v1280, 1
    %v1332 = vsel %vm269, %v1330, %v1331
    %v1333 = vrot.slane %v1265, 1
    %v1334 = vrot.slane %v1281, 1
    %v1335 = vsel %vm269, %v1333, %v1334
    %v1336 = vrot.slane %v1266, 1
    %v1337 = vrot.slane %v1282, 1
    %v1338 = vsel %vm269, %v1336, %v1337
    %v1339 = vrot.slane %v1267, 1
    %v1340 = vrot.slane %v1283, 1
    %v1341 = vsel %vm269, %v1339, %v1340
    %v1342 = vrot.slane %v1269, 1
    %v1343 = vrot.slane %v1285, 1
    %v1344 = vsel %vm269, %v1342, %v1343
    %v1345 = vrot.slane %v1270, 1
    %v1346 = vrot.slane %v1286, 1
    %v1347 = vsel %vm269, %v1345, %v1346
    %v1348 = vrot.slane %v1271, 1
    %v1349 = vrot.slane %v1287, 1
    %v1350 = vsel %vm269, %v1348, %v1349
    %v1351 = vrot.slane %v1272, 1
    %v1352 = vrot.slane %v1288, 1
    %v1353 = vsel %vm269, %v1351, %v1352
    %v1354 = vrot.slane %v1273, 1
    %v1355 = vrot.slane %v1289, 1
    %v1356 = vsel %vm269, %v1354, %v1355
    %v1357 = vrot.slane %v1274, 1
    %v1358 = vrot.slane %v1290, 1
    %v1359 = vsel %vm269, %v1357, %v1358
    %v1360 = vrot.slane %v1275, 1
    %v1361 = vrot.slane %v1291, 1
    %v1362 = vsel %vm269, %v1360, %v1361
    %v1378 = vrot.slane %v1261, 2
    %v1379 = vrot.slane %v1277, 2
    %v1380 = vsel %vm315, %v1378, %v1379
    %v1381 = vrot.slane %v1262, 2
    %v1382 = vrot.slane %v1278, 2
    %v1383 = vsel %vm315, %v1381, %v1382
    %v1384 = vrot.slane %v1263, 2
    %v1385 = vrot.slane %v1279, 2
    %v1386 = vsel %vm315, %v1384, %v1385
    %v1387 = vrot.slane %v1264, 2
    %v1388 = vrot.slane %v1280, 2
    %v1389 = vsel %vm315, %v1387, %v1388
    %v1390 = vrot.slane %v1265, 2
    %v1391 = vrot.slane %v1281, 2
    %v1392 = vsel %vm315, %v1390, %v1391
    %v1393 = vrot.slane %v1266, 2
    %v1394 = vrot.slane %v1282, 2
    %v1395 = vsel %vm315, %v1393, %v1394
    %v1396 = vrot.slane %v1267, 2
    %v1397 = vrot.slane %v1283, 2
    %v1398 = vsel %vm315, %v1396, %v1397
    %v1399 = vrot.slane %v1269, 2
    %v1400 = vrot.slane %v1285, 2
    %v1401 = vsel %vm315, %v1399, %v1400
    %v1402 = vrot.slane %v1270, 2
    %v1403 = vrot.slane %v1286, 2
    %v1404 = vsel %vm315, %v1402, %v1403
    %v1405 = vrot.slane %v1271, 2
    %v1406 = vrot.slane %v1287, 2
    %v1407 = vsel %vm315, %v1405, %v1406
    %v1408 = vrot.slane %v1272, 2
    %v1409 = vrot.slane %v1288, 2
    %v1410 = vsel %vm315, %v1408, %v1409
    %v1411 = vrot.slane %v1273, 2
    %v1412 = vrot.slane %v1289, 2
    %v1413 = vsel %vm315, %v1411, %v1412
    %v1414 = vrot.slane %v1274, 2
    %v1415 = vrot.slane %v1290, 2
    %v1416 = vsel %vm315, %v1414, %v1415
    %v1417 = vrot.slane %v1275, 2
    %v1418 = vrot.slane %v1291, 2
    %v1419 = vsel %vm315, %v1417, %v1418
    %v1439 = vrot.slane %v1268, 1
    %v1440 = vrot.slane %v1284, 1
    %v1441 = vsel %vm269, %v1439, %v1440
    %v1442 = vrot.slane %v1276, 1
    %v1443 = vrot.slane %v1292, 1
    %v1444 = vsel %vm269, %v1442, %v1443
    %v1447 = vrot.slane %v1268, 2
    %v1448 = vrot.slane %v1284, 2
    %v1449 = vsel %vm315, %v1447, %v1448
    %v1450 = vrot.slane %v1276, 2
    %v1451 = vrot.slane %v1292, 2
    %v1452 = vsel %vm315, %v1450, %v1451
    %v1455 = vld [vmem:[#allocation2] sm:$0xff]
    %v1456 = vld [vmem:[#allocation2 + $0x8] sm:$0xff]
    %v1457 = vld [vmem:[#allocation2 + $0x10] sm:$0xff]
    %v1458 = vld [vmem:[#allocation2 + $0x18] sm:$0xff]
    %v1459 = vld [vmem:[#allocation2 + $0x20] sm:$0xff]
    %v1460 = vld [vmem:[#allocation2 + $0x28] sm:$0xff]
    %v1461 = vld [vmem:[#allocation2 + $0x30] sm:$0xff]
    %v1462 = vld [vmem:[#allocation2 + $0x38] sm:$0xff]
    %v1463 = vld [vmem:[#allocation2 + $0x40] sm:$0xff]
    %v1464 = vld [vmem:[#allocation2 + $0x48] sm:$0xff]
    %v1465 = vld [vmem:[#allocation2 + $0x50] sm:$0xff]
    %v1466 = vld [vmem:[#allocation2 + $0x58] sm:$0xff]
    %v1467 = vld [vmem:[#allocation2 + $0x60] sm:$0xff]
    %v1468 = vld [vmem:[#allocation2 + $0x68] sm:$0xff]
    %v1469 = vld [vmem:[#allocation2 + $0x70] sm:$0xff]
    %v1470 = vld [vmem:[#allocation2 + $0x78] sm:$0xff]
    %v1471 = vld [vmem:[#allocation2 + $0x80] sm:$0xff]
    %v1472 = vld [vmem:[#allocation2 + $0x88] sm:$0xff]
    %v1473 = vld [vmem:[#allocation2 + $0x90] sm:$0xff]
    %v1474 = vld [vmem:[#allocation2 + $0x98] sm:$0xff]
    %v1475 = vld [vmem:[#allocation2 + $0xa0] sm:$0xff]
    %v1476 = vld [vmem:[#allocation2 + $0xa8] sm:$0xff]
    %v1477 = vld [vmem:[#allocation2 + $0xb0] sm:$0xff]
    %v1478 = vld [vmem:[#allocation2 + $0xb8] sm:$0xff]
    %v1479 = vld [vmem:[#allocation2 + $0xc0] sm:$0xff]
    %v1480 = vld [vmem:[#allocation2 + $0xc8] sm:$0xff]
    %v1481 = vld [vmem:[#allocation2 + $0xd0] sm:$0xff]
    %v1482 = vld [vmem:[#allocation2 + $0xd8] sm:$0xff]
    %v1483 = vld [vmem:[#allocation2 + $0xe0] sm:$0xff]
    %v1484 = vld [vmem:[#allocation2 + $0xe8] sm:$0xff]
    %v1485 = vld [vmem:[#allocation2 + $0xf0] sm:$0xff]
    %v1486 = vld [vmem:[#allocation2 + $0xf8] sm:$0xff]
    %v1487 = vld [vmem:[#allocation2 + $0x100] sm:$0xff]
    %v1488 = vld [vmem:[#allocation2 + $0x108] sm:$0xff]
    %v1489 = vld [vmem:[#allocation2 + $0x110] sm:$0xff]
    %v1490 = vld [vmem:[#allocation2 + $0x118] sm:$0xff]
    %v1491 = vld [vmem:[#allocation2 + $0x120] sm:$0xff]
    %v1492 = vld [vmem:[#allocation2 + $0x128] sm:$0xff]
    %v1493 = vld [vmem:[#allocation2 + $0x130] sm:$0xff]
    %v1494 = vld [vmem:[#allocation2 + $0x138] sm:$0xff]
    %v1495 = vld [vmem:[#allocation2 + $0x140] sm:$0xff]
    %v1496 = vld [vmem:[#allocation2 + $0x148] sm:$0xff]
    %v1497 = vld [vmem:[#allocation2 + $0x150] sm:$0xff]
    %v1498 = vld [vmem:[#allocation2 + $0x158] sm:$0xff]
    %v1499 = vld [vmem:[#allocation2 + $0x160] sm:$0xff]
    %v1500 = vld [vmem:[#allocation2 + $0x168] sm:$0xff]
    %v1501 = vld [vmem:[#allocation2 + $0x170] sm:$0xff]
    %v1502 = vld [vmem:[#allocation2 + $0x178] sm:$0xff]
    %v1503 = vld [vmem:[#allocation2 + $0x180] sm:$0xff]
    %v1504 = vld [vmem:[#allocation2 + $0x188] sm:$0xff]
    %v1505 = vld [vmem:[#allocation2 + $0x190] sm:$0xff]
    %v1506 = vld [vmem:[#allocation2 + $0x198] sm:$0xff]
    %v1507 = vld [vmem:[#allocation2 + $0x1a0] sm:$0xff]
    %v1508 = vld [vmem:[#allocation2 + $0x1a8] sm:$0xff]
    %v1509 = vld [vmem:[#allocation2 + $0x1b0] sm:$0xff]
    %v1510 = vld [vmem:[#allocation2 + $0x1b8] sm:$0xff]
    %v1511 = vld [vmem:[#allocation2 + $0x1c0] sm:$0xff]
    %v1512 = vld [vmem:[#allocation2 + $0x1c8] sm:$0xff]
    %v1513 = vld [vmem:[#allocation2 + $0x1d0] sm:$0xff]
    %v1514 = vld [vmem:[#allocation2 + $0x1d8] sm:$0xff]
    %v1515 = vld [vmem:[#allocation2 + $0x1e0] sm:$0xff]
    %v1516 = vld [vmem:[#allocation2 + $0x1e8] sm:$0xff]
    %v1517 = vld [vmem:[#allocation2 + $0x1f0] sm:$0xff]
    %v1518 = vld [vmem:[#allocation2 + $0x1f8] sm:$0xff]
    %v1519 = vld [vmem:[#allocation2 + $0x200] sm:$0xff]
    %v1520 = vld [vmem:[#allocation2 + $0x208] sm:$0xff]
    %v1521 = vld [vmem:[#allocation2 + $0x210] sm:$0xff]
    %v1522 = vld [vmem:[#allocation2 + $0x218] sm:$0xff]
    %v1523 = vld [vmem:[#allocation2 + $0x220] sm:$0xff]
    %v1524 = vld [vmem:[#allocation2 + $0x228] sm:$0xff]
    %v1525 = vld [vmem:[#allocation2 + $0x230] sm:$0xff]
    %v1526 = vld [vmem:[#allocation2 + $0x238] sm:$0xff]
    %v1527 = vld [vmem:[#allocation2 + $0x240] sm:$0xff]
    %v1528 = vld [vmem:[#allocation2 + $0x248] sm:$0xff]
    %v1529 = vld [vmem:[#allocation2 + $0x250] sm:$0xff]
    %v1530 = vld [vmem:[#allocation2 + $0x258] sm:$0xff]
    %v1531 = vld [vmem:[#allocation2 + $0x260] sm:$0xff]
    %v1532 = vld [vmem:[#allocation2 + $0x268] sm:$0xff]
    %v1533 = vld [vmem:[#allocation2 + $0x270] sm:$0xff]
    %v1534 = vld [vmem:[#allocation2 + $0x278] sm:$0xff]
    %v1535 = vld [vmem:[#allocation2 + $0x280] sm:$0xff]
    %v1536 = vld [vmem:[#allocation2 + $0x288] sm:$0xff]
    %v1537 = vld [vmem:[#allocation2 + $0x290] sm:$0xff]
    %v1538 = vld [vmem:[#allocation2 + $0x298] sm:$0xff]
    %v1539 = vld [vmem:[#allocation2 + $0x2a0] sm:$0xff]
    %v1540 = vld [vmem:[#allocation2 + $0x2a8] sm:$0xff]
    %v1541 = vld [vmem:[#allocation2 + $0x2b0] sm:$0xff]
    %v1542 = vld [vmem:[#allocation2 + $0x2b8] sm:$0xff]
    %v1543 = vld [vmem:[#allocation2 + $0x2c0] sm:$0xff]
    %v1544 = vld [vmem:[#allocation2 + $0x2c8] sm:$0xff]
    %v1545 = vld [vmem:[#allocation2 + $0x2d0] sm:$0xff]
    %v1546 = vld [vmem:[#allocation2 + $0x2d8] sm:$0xff]
    %v1547 = vld [vmem:[#allocation2 + $0x2e0] sm:$0xff]
    %v1548 = vld [vmem:[#allocation2 + $0x2e8] sm:$0xff]
    %v1549 = vld [vmem:[#allocation2 + $0x2f0] sm:$0xff]
    %v1550 = vld [vmem:[#allocation2 + $0x2f8] sm:$0xff]
    %v1551 = vld [vmem:[#allocation2 + $0x300] sm:$0xff]
    %v1552 = vld [vmem:[#allocation2 + $0x308] sm:$0xff]
    %v1553 = vld [vmem:[#allocation2 + $0x310] sm:$0xff]
    %v1554 = vld [vmem:[#allocation2 + $0x318] sm:$0xff]
    %v1555 = vld [vmem:[#allocation2 + $0x320] sm:$0xff]
    %v1556 = vld [vmem:[#allocation2 + $0x328] sm:$0xff]
    %v1557 = vld [vmem:[#allocation2 + $0x330] sm:$0xff]
    %v1558 = vld [vmem:[#allocation2 + $0x338] sm:$0xff]
    %v1559 = vld [vmem:[#allocation2 + $0x340] sm:$0xff]
    %v1560 = vld [vmem:[#allocation2 + $0x348] sm:$0xff]
    %v1561 = vld [vmem:[#allocation2 + $0x350] sm:$0xff]
    %v1562 = vld [vmem:[#allocation2 + $0x358] sm:$0xff]
    %v1563 = vld [vmem:[#allocation2 + $0x360] sm:$0xff]
    %v1564 = vld [vmem:[#allocation2 + $0x368] sm:$0xff]
    %v1565 = vld [vmem:[#allocation2 + $0x370] sm:$0xff]
    %v1566 = vld [vmem:[#allocation2 + $0x378] sm:$0xff]
    %v1567 = vld [vmem:[#allocation2 + $0x380] sm:$0xff]
    %v1568 = vld [vmem:[#allocation2 + $0x388] sm:$0xff]
    %v1569 = vld [vmem:[#allocation2 + $0x390] sm:$0xff]
    %v1570 = vld [vmem:[#allocation2 + $0x398] sm:$0xff]
    %v1571 = vld [vmem:[#allocation2 + $0x3a0] sm:$0xff]
    %v1572 = vld [vmem:[#allocation2 + $0x3a8] sm:$0xff]
    %v1573 = vld [vmem:[#allocation2 + $0x3b0] sm:$0xff]
    %v1574 = vld [vmem:[#allocation2 + $0x3b8] sm:$0xff]
    %v1575 = vld [vmem:[#allocation2 + $0x3c0] sm:$0xff]
    %v1576 = vld [vmem:[#allocation2 + $0x3c8] sm:$0xff]
    %v1577 = vld [vmem:[#allocation2 + $0x3d0] sm:$0xff]
    %v1578 = vld [vmem:[#allocation2 + $0x3d8] sm:$0xff]
    %v1579 = vld [vmem:[#allocation2 + $0x3e0] sm:$0xff]
    %v1580 = vld [vmem:[#allocation2 + $0x3e8] sm:$0xff]
    %v1581 = vld [vmem:[#allocation2 + $0x3f0] sm:$0xff]
    %v1582 = vld [vmem:[#allocation2 + $0x3f8] sm:$0xff]
    %v1583 = vld [vmem:[#allocation2 + $0x400] sm:$0xff]
    %v1584 = vld [vmem:[#allocation2 + $0x408] sm:$0xff]
    %v1585 = vld [vmem:[#allocation2 + $0x410] sm:$0xff]
    %v1586 = vld [vmem:[#allocation2 + $0x418] sm:$0xff]
    %v1587 = vld [vmem:[#allocation2 + $0x420] sm:$0xff]
    %v1588 = vld [vmem:[#allocation2 + $0x428] sm:$0xff]
    %v1589 = vld [vmem:[#allocation2 + $0x430] sm:$0xff]
    %v1590 = vld [vmem:[#allocation2 + $0x438] sm:$0xff]
    %v1591 = vld [vmem:[#allocation2 + $0x440] sm:$0xff]
    %v1592 = vld [vmem:[#allocation2 + $0x448] sm:$0xff]
    %v1593 = vld [vmem:[#allocation2 + $0x450] sm:$0xff]
    %v1594 = vld [vmem:[#allocation2 + $0x458] sm:$0xff]
    %v1595 = vld [vmem:[#allocation2 + $0x460] sm:$0xff]
    %v1596 = vld [vmem:[#allocation2 + $0x468] sm:$0xff]
    %v1597 = vld [vmem:[#allocation2 + $0x470] sm:$0xff]
    %v1598 = vld [vmem:[#allocation2 + $0x478] sm:$0xff]
    %1599 = vmatprep.subr.mxu0 0.0
    %1600 = vmatpush1.msra.mxu0 %v1455
    %1601 = vmatprep.subr.mxu0 0.0
    %1602 = vmatpush1.msra.mxu0 %v1456
    %1603 = vmatprep.subr.mxu0 0.0
    %1604 = vmatpush1.msra.mxu0 %v1457
    %1605 = vmatprep.subr.mxu0 0.0
    %1606 = vmatpush1.msra.mxu0 %v1458
    %1607 = vmatprep.subr.mxu0 0.0
    %1608 = vmatpush1.msra.mxu0 %v1459
    %1609 = vmatprep.subr.mxu0 0.0
    %1610 = vmatpush1.msra.mxu0 %v1460
    %1611 = vmatprep.subr.mxu0 0.0
    %1612 = vmatpush1.msra.mxu0 %v1461
    %1613 = vmatprep.subr.mxu0 0.0
    %1614 = vmatpush1.msra.mxu0 %v1462
    %1615 = vmatprep.subr.mxu0 0.0
    %1616 = vmatpush1.msra.mxu0 %v1463
    %1617 = vmatprep.subr.mxu0 0.0
    %1618 = vmatpush1.msra.mxu0 %v1464
    %1619 = vmatprep.subr.mxu0 0.0
    %1620 = vmatpush1.msra.mxu0 %v1465
    %1621 = vmatprep.subr.mxu0 0.0
    %1622 = vmatpush1.msra.mxu0 %v1466
    %1623 = vmatprep.subr.mxu0 0.0
    %1624 = vmatpush1.msra.mxu0 %v1467
    %1625 = vmatprep.subr.mxu0 0.0
    %1626 = vmatpush1.msra.mxu0 %v1468
    %1627 = vmatprep.subr.mxu0 0.0
    %1628 = vmatpush1.msra.mxu0 %v1469
    %1629 = vmatprep.subr.mxu0 0.0
    %1630 = vmatpush1.msra.mxu0 %v1470
    %1631 = vmatprep.subr.mxu0 0.0
    %1632 = vmatpush1.msra.mxu0 %v1471
    %1633 = vmatprep.subr.mxu0 0.0
    %1634 = vmatpush1.msra.mxu0 %v1472
    %1635 = vmatprep.subr.mxu0 0.0
    %1636 = vmatpush1.msra.mxu0 %v1473
    %1637 = vmatprep.subr.mxu0 0.0
    %1638 = vmatpush1.msra.mxu0 %v1474
    %1639 = vmatprep.subr.mxu0 0.0
    %1640 = vmatpush1.msra.mxu0 %v1475
    %1641 = vmatprep.subr.mxu0 0.0
    %1642 = vmatpush1.msra.mxu0 %v1476
    %1643 = vmatprep.subr.mxu0 0.0
    %1644 = vmatpush1.msra.mxu0 %v1477
    %1645 = vmatprep.subr.mxu0 0.0
    %1646 = vmatpush1.msra.mxu0 %v1478
    %1647 = vmatprep.subr.mxu0 0.0
    %1648 = vmatpush1.msra.mxu0 %v1479
    %1649 = vmatprep.subr.mxu0 0.0
    %1650 = vmatpush1.msra.mxu0 %v1480
    %1651 = vmatprep.subr.mxu0 0.0
    %1652 = vmatpush1.msra.mxu0 %v1481
    %1653 = vmatprep.subr.mxu0 0.0
    %1654 = vmatpush1.msra.mxu0 %v1482
    %1655 = vmatprep.subr.mxu0 0.0
    %1656 = vmatpush1.msra.mxu0 %v1483
    %1657 = vmatprep.subr.mxu0 0.0
    %1658 = vmatpush1.msra.mxu0 %v1484
    %1659 = vmatprep.subr.mxu0 0.0
    %1660 = vmatpush1.msra.mxu0 %v1485
    %1661 = vmatprep.subr.mxu0 0.0
    %1662 = vmatpush1.msra.mxu0 %v1486
    %1663 = vmatprep.mubr.f32.mxu0 %v272
    %1664 = vmatmul.mubr.f32.gmra.mrb[0].mxu0 %v205
    %v1665 = vpop.f32.mrb[0].mxu0
    %v1666 = vadd.f32 0.0, %v1665
    %v1667 = vpop.f32.mrb[0].mxu0
    %1668 = vmatprep.mubr.f32.mxu0 %v1323
    %1669 = vmatmul.mubr.f32.gmra.mrb[0].mxu0 %v1261
    %v1670 = vpop.f32.mrb[0].mxu0
    %v1671 = vadd.f32 0.0, %v1670
    %v1672 = vpop.f32.mrb[0].mxu0
    %1673 = vmatprep.mubr.f32.mxu0 %v1326
    %1674 = vmatmul.mubr.f32.gmra.mrb[0].mxu0 %v1262
    %v1675 = vpop.f32.mrb[0].mxu0
    %v1676 = vadd.f32 0.0, %v1675
    %v1677 = vpop.f32.mrb[0].mxu0
    %1678 = vmatprep.mubr.f32.mxu0 %v1329
    %1679 = vmatmul.mubr.f32.gmra.mrb[0].mxu0 %v1263
    %v1680 = vpop.f32.mrb[0].mxu0
    %v1681 = vadd.f32 0.0, %v1680
    %v1682 = vpop.f32.mrb[0].mxu0
    %1683 = vmatprep.mubr.f32.mxu0 %v1332
    %1684 = vmatmul.mubr.f32.gmra.mrb[0].mxu0 %v1264
    %v1685 = vpop.f32.mrb[0].mxu0
    %v1686 = vadd.f32 0.0, %v1685
    %v1687 = vpop.f32.mrb[0].mxu0
    %1688 = vmatprep.mubr.f32.mxu0 %v1335
    %1689 = vmatmul.mubr.f32.gmra.mrb[0].mxu0 %v1265
    %v1690 = vpop.f32.mrb[0].mxu0
    %v1691 = vadd.f32 0.0, %v1690
    %v1692 = vpop.f32.mrb[0].mxu0
    %1693 = vmatprep.mubr.f32.mxu0 %v1338
    %1694 = vmatmul.mubr.f32.gmra.mrb[0].mxu0 %v1266
    %v1695 = vpop.f32.mrb[0].mxu0
    %v1696 = vadd.f32 0.0, %v1695
    %v1697 = vpop.f32.mrb[0].mxu0
    %1698 = vmatprep.mubr.f32.mxu0 %v1341
    %1699 = vmatmul.mubr.f32.gmra.mrb[0].mxu0 %v1267
    %v1700 = vpop.f32.mrb[0].mxu0
    %v1701 = vadd.f32 0.0, %v1700
    %v1702 = vpop.f32.mrb[0].mxu0
    %1703 = vmatprep.mubr.f32.mxu0 %v272
    %1704 = vmatmul.mubr.f32.gmra.mrb[0].mxu0 %v205
    %v1705 = vpop.f32.mrb[0].mxu0
    %v1706 = vadd.f32 0.0, %v1705
    %v1707 = vpop.f32.mrb[0].mxu0
    %1708 = vmatprep.mubr.f32.mxu0 %v1344
    %1709 = vmatmul.mubr.f32.gmra.mrb[0].mxu0 %v1269
    %v1710 = vpop.f32.mrb[0].mxu0
    %v1711 = vadd.f32 0.0, %v1710
    %v1712 = vpop.f32.mrb[0].mxu0
    %1713 = vmatprep.mubr.f32.mxu0 %v1347
    %1714 = vmatmul.mubr.f32.gmra.mrb[0].mxu0 %v1270
    %v1715 = vpop.f32.mrb[0].mxu0
    %v1716 = vadd.f32 0.0, %v1715
    %v1717 = vpop.f32.mrb[0].mxu0
    %1718 = vmatprep.mubr.f32.mxu0 %v1350
    %1719 = vmatmul.mubr.f32.gmra.mrb[0].mxu0 %v1271
    %v1720 = vpop.f32.mrb[0].mxu0
    %v1721 = vadd.f32 0.0, %v1720
    %v1722 = vpop.f32.mrb[0].mxu0
    %1723 = vmatprep.mubr.f32.mxu0 %v1353
    %1724 = vmatmul.mubr.f32.gmra.mrb[0].mxu0 %v1272
    %v1725 = vpop.f32.mrb[0].mxu0
    %v1726 = vadd.f32 0.0, %v1725
    %v1727 = vpop.f32.mrb[0].mxu0
    %1728 = vmatprep.mubr.f32.mxu0 %v1356
    %1729 = vmatmul.mubr.f32.gmra.mrb[0].mxu0 %v1273
    %v1730 = vpop.f32.mrb[0].mxu0
    %v1731 = vadd.f32 0.0, %v1730
    %v1732 = vpop.f32.mrb[0].mxu0
    %1733 = vmatprep.mubr.f32.mxu0 %v1359
    %1734 = vmatmul.mubr.f32.gmra.mrb[0].mxu0 %v1274
    %v1735 = vpop.f32.mrb[0].mxu0
    %v1736 = vadd.f32 0.0, %v1735
    %v1737 = vpop.f32.mrb[0].mxu0
    %1738 = vmatprep.mubr.f32.mxu0 %v1362
    %1739 = vmatmul.mubr.f32.gmra.mrb[0].mxu0 %v1275
    %v1740 = vpop.f32.mrb[0].mxu0
    %v1741 = vadd.f32 0.0, %v1740
    %v1742 = vpop.f32.mrb[0].mxu0
    %1743 = vdwg.mxu0
    %1744 = vmatprep.subr.mxu0 0.0
    %1745 = vmatpush1.msra.mxu0 %v1487
    %1746 = vmatprep.subr.mxu0 0.0
    %1747 = vmatpush1.msra.mxu0 %v1488
    %1748 = vmatprep.subr.mxu0 0.0
    %1749 = vmatpush1.msra.mxu0 %v1489
    %1750 = vmatprep.subr.mxu0 0.0
    %1751 = vmatpush1.msra.mxu0 %v1490
    %1752 = vmatprep.subr.mxu0 0.0
    %1753 = vmatpush1.msra.mxu0 %v1491
    %1754 = vmatprep.subr.mxu0 0.0
    %1755 = vmatpush1.msra.mxu0 %v1492
    %1756 = vmatprep.subr.mxu0 0.0
    %1757 = vmatpush1.msra.mxu0 %v1493
    %1758 = vmatprep.subr.mxu0 0.0
    %1759 = vmatpush1.msra.mxu0 %v1494
    %1760 = vmatprep.subr.mxu0 0.0
    %1761 = vmatpush1.msra.mxu0 %v1495
    %1762 = vmatprep.subr.mxu0 0.0
    %1763 = vmatpush1.msra.mxu0 %v1496
    %1764 = vmatprep.subr.mxu0 0.0
    %1765 = vmatpush1.msra.mxu0 %v1497
    %1766 = vmatprep.subr.mxu0 0.0
    %1767 = vmatpush1.msra.mxu0 %v1498
    %1768 = vmatprep.subr.mxu0 0.0
    %1769 = vmatpush1.msra.mxu0 %v1499
    %1770 = vmatprep.subr.mxu0 0.0
    %1771 = vmatpush1.msra.mxu0 %v1500
    %1772 = vmatprep.subr.mxu0 0.0
    %1773 = vmatpush1.msra.mxu0 %v1501
    %1774 = vmatprep.subr.mxu0 0.0
    %1775 = vmatpush1.msra.mxu0 %v1502
    %1776 = vmatprep.subr.mxu0 0.0
    %1777 = vmatpush1.msra.mxu0 %v1503
    %1778 = vmatprep.subr.mxu0 0.0
    %1779 = vmatpush1.msra.mxu0 %v1504
    %1780 = vmatprep.subr.mxu0 0.0
    %1781 = vmatpush1.msra.mxu0 %v1505
    %1782 = vmatprep.subr.mxu0 0.0
    %1783 = vmatpush1.msra.mxu0 %v1506
    %1784 = vmatprep.subr.mxu0 0.0
    %1785 = vmatpush1.msra.mxu0 %v1507
    %1786 = vmatprep.subr.mxu0 0.0
    %1787 = vmatpush1.msra.mxu0 %v1508
    %1788 = vmatprep.subr.mxu0 0.0
    %1789 = vmatpush1.msra.mxu0 %v1509
    %1790 = vmatprep.subr.mxu0 0.0
    %1791 = vmatpush1.msra.mxu0 %v1510
    %1792 = vmatprep.subr.mxu0 0.0
    %1793 = vmatpush1.msra.mxu0 %v1511
    %1794 = vmatprep.subr.mxu0 0.0
    %1795 = vmatpush1.msra.mxu0 %v1512
    %1796 = vmatprep.subr.mxu0 0.0
    %1797 = vmatpush1.msra.mxu0 %v1513
    %1798 = vmatprep.subr.mxu0 0.0
    %1799 = vmatpush1.msra.mxu0 %v1514
    %1800 = vmatprep.subr.mxu0 0.0
    %1801 = vmatpush1.msra.mxu0 %v1515
    %1802 = vmatprep.subr.mxu0 0.0
    %1803 = vmatpush1.msra.mxu0 %v1516
    %1804 = vmatprep.subr.mxu0 0.0
    %1805 = vmatpush1.msra.mxu0 %v1517
    %1806 = vmatprep.subr.mxu0 0.0
    %1807 = vmatpush1.msra.mxu0 %v1518
    %1808 = vmatprep.mubr.f32.mxu0 %v1261
    %1809 = vmatmul.mubr.f32.gmra.mrb[0].mxu0 %v318
    %v1810 = vpop.f32.mrb[0].mxu0
    %v1811 = vadd.f32 %v1666, %v1810
    %v1812 = vpop.f32.mrb[0].mxu0
    %1813 = vmatprep.mubr.f32.mxu0 %v1262
    %1814 = vmatmul.mubr.f32.gmra.mrb[0].mxu0 %v1380
    %v1815 = vpop.f32.mrb[0].mxu0
    %v1816 = vadd.f32 %v1671, %v1815
    %v1817 = vpop.f32.mrb[0].mxu0
    %1818 = vmatprep.mubr.f32.mxu0 %v1263
    %1819 = vmatmul.mubr.f32.gmra.mrb[0].mxu0 %v1383
    %v1820 = vpop.f32.mrb[0].mxu0
    %v1821 = vadd.f32 %v1676, %v1820
    %v1822 = vpop.f32.mrb[0].mxu0
    %1823 = vmatprep.mubr.f32.mxu0 %v1264
    %1824 = vmatmul.mubr.f32.gmra.mrb[0].mxu0 %v1386
    %v1825 = vpop.f32.mrb[0].mxu0
    %v1826 = vadd.f32 %v1681, %v1825
    %v1827 = vpop.f32.mrb[0].mxu0
    %1828 = vmatprep.mubr.f32.mxu0 %v1265
    %1829 = vmatmul.mubr.f32.gmra.mrb[0].mxu0 %v1389
    %v1830 = vpop.f32.mrb[0].mxu0
    %v1831 = vadd.f32 %v1686, %v1830
    %v1832 = vpop.f32.mrb[0].mxu0
    %1833 = vmatprep.mubr.f32.mxu0 %v1266
    %1834 = vmatmul.mubr.f32.gmra.mrb[0].mxu0 %v1392
    %v1835 = vpop.f32.mrb[0].mxu0
    %v1836 = vadd.f32 %v1691, %v1835
    %v1837 = vpop.f32.mrb[0].mxu0
    %1838 = vmatprep.mubr.f32.mxu0 %v1267
    %1839 = vmatmul.mubr.f32.gmra.mrb[0].mxu0 %v1395
    %v1840 = vpop.f32.mrb[0].mxu0
    %v1841 = vadd.f32 %v1696, %v1840
    %v1842 = vpop.f32.mrb[0].mxu0
    %1843 = vmatprep.mubr.f32.mxu0 %v1268
    %1844 = vmatmul.mubr.f32.gmra.mrb[0].mxu0 %v1398
    %v1845 = vpop.f32.mrb[0].mxu0
    %v1846 = vadd.f32 %v1701, %v1845
    %v1847 = vpop.f32.mrb[0].mxu0
    %1848 = vmatprep.mubr.f32.mxu0 %v1269
    %1849 = vmatmul.mubr.f32.gmra.mrb[0].mxu0 %v318
    %v1850 = vpop.f32.mrb[0].mxu0
    %v1851 = vadd.f32 %v1706, %v1850
    %v1852 = vpop.f32.mrb[0].mxu0
    %1853 = vmatprep.mubr.f32.mxu0 %v1270
    %1854 = vmatmul.mubr.f32.gmra.mrb[0].mxu0 %v1401
    %v1855 = vpop.f32.mrb[0].mxu0
    %v1856 = vadd.f32 %v1711, %v1855
    %v1857 = vpop.f32.mrb[0].mxu0
    %1858 = vmatprep.mubr.f32.mxu0 %v1271
    %1859 = vmatmul.mubr.f32.gmra.mrb[0].mxu0 %v1404
    %v1860 = vpop.f32.mrb[0].mxu0
    %v1861 = vadd.f32 %v1716, %v1860
    %v1862 = vpop.f32.mrb[0].mxu0
    %1863 = vmatprep.mubr.f32.mxu0 %v1272
    %1864 = vmatmul.mubr.f32.gmra.mrb[0].mxu0 %v1407
    %v1865 = vpop.f32.mrb[0].mxu0
    %v1866 = vadd.f32 %v1721, %v1865
    %v1867 = vpop.f32.mrb[0].mxu0
    %1868 = vmatprep.mubr.f32.mxu0 %v1273
    %1869 = vmatmul.mubr.f32.gmra.mrb[0].mxu0 %v1410
    %v1870 = vpop.f32.mrb[0].mxu0
    %v1871 = vadd.f32 %v1726, %v1870
    %v1872 = vpop.f32.mrb[0].mxu0
    %1873 = vmatprep.mubr.f32.mxu0 %v1274
    %1874 = vmatmul.mubr.f32.gmra.mrb[0].mxu0 %v1413
    %v1875 = vpop.f32.mrb[0].mxu0
    %v1876 = vadd.f32 %v1731, %v1875
    %v1877 = vpop.f32.mrb[0].mxu0
    %1878 = vmatprep.mubr.f32.mxu0 %v1275
    %1879 = vmatmul.mubr.f32.gmra.mrb[0].mxu0 %v1416
    %v1880 = vpop.f32.mrb[0].mxu0
    %v1881 = vadd.f32 %v1736, %v1880
    %v1882 = vpop.f32.mrb[0].mxu0
    %1883 = vmatprep.mubr.f32.mxu0 %v1276
    %1884 = vmatmul.mubr.f32.gmra.mrb[0].mxu0 %v1419
    %v1885 = vpop.f32.mrb[0].mxu0
    %v1886 = vadd.f32 %v1741, %v1885
    %v1887 = vpop.f32.mrb[0].mxu0
    %1888 = vdwg.mxu0
    %1889 = vmatprep.subr.mxu0 0.0
    %1890 = vmatpush1.msra.mxu0 %v1519
    %1891 = vmatprep.subr.mxu0 0.0
    %1892 = vmatpush1.msra.mxu0 %v1520
    %1893 = vmatprep.subr.mxu0 0.0
    %1894 = vmatpush1.msra.mxu0 %v1521
    %1895 = vmatprep.subr.mxu0 0.0
    %1896 = vmatpush1.msra.mxu0 %v1522
    %1897 = vmatprep.subr.mxu0 0.0
    %1898 = vmatpush1.msra.mxu0 %v1523
    %1899 = vmatprep.subr.mxu0 0.0
    %1900 = vmatpush1.msra.mxu0 %v1524
    %1901 = vmatprep.subr.mxu0 0.0
    %1902 = vmatpush1.msra.mxu0 %v1525
    %1903 = vmatprep.subr.mxu0 0.0
    %1904 = vmatpush1.msra.mxu0 %v1526
    %1905 = vmatprep.subr.mxu0 0.0
    %1906 = vmatpush1.msra.mxu0 %v1527
    %1907 = vmatprep.subr.mxu0 0.0
    %1908 = vmatpush1.msra.mxu0 %v1528
    %1909 = vmatprep.subr.mxu0 0.0
    %1910 = vmatpush1.msra.mxu0 %v1529
    %1911 = vmatprep.subr.mxu0 0.0
    %1912 = vmatpush1.msra.mxu0 %v1530
    %1913 = vmatprep.subr.mxu0 0.0
    %1914 = vmatpush1.msra.mxu0 %v1531
    %1915 = vmatprep.subr.mxu0 0.0
    %1916 = vmatpush1.msra.mxu0 %v1532
    %1917 = vmatprep.subr.mxu0 0.0
    %1918 = vmatpush1.msra.mxu0 %v1533
    %1919 = vmatprep.subr.mxu0 0.0
    %1920 = vmatpush1.msra.mxu0 %v1534
    %1921 = vmatprep.subr.mxu0 0.0
    %1922 = vmatpush1.msra.mxu0 %v1535
    %1923 = vmatprep.subr.mxu0 0.0
    %1924 = vmatpush1.msra.mxu0 %v1536
    %1925 = vmatprep.subr.mxu0 0.0
    %1926 = vmatpush1.msra.mxu0 %v1537
    %1927 = vmatprep.subr.mxu0 0.0
    %1928 = vmatpush1.msra.mxu0 %v1538
    %1929 = vmatprep.subr.mxu0 0.0
    %1930 = vmatpush1.msra.mxu0 %v1539
    %1931 = vmatprep.subr.mxu0 0.0
    %1932 = vmatpush1.msra.mxu0 %v1540
    %1933 = vmatprep.subr.mxu0 0.0
    %1934 = vmatpush1.msra.mxu0 %v1541
    %1935 = vmatprep.subr.mxu0 0.0
    %1936 = vmatpush1.msra.mxu0 %v1542
    %1937 = vmatprep.subr.mxu0 0.0
    %1938 = vmatpush1.msra.mxu0 %v1543
    %1939 = vmatprep.subr.mxu0 0.0
    %1940 = vmatpush1.msra.mxu0 %v1544
    %1941 = vmatprep.subr.mxu0 0.0
    %1942 = vmatpush1.msra.mxu0 %v1545
    %1943 = vmatprep.subr.mxu0 0.0
    %1944 = vmatpush1.msra.mxu0 %v1546
    %1945 = vmatprep.subr.mxu0 0.0
    %1946 = vmatpush1.msra.mxu0 %v1547
    %1947 = vmatprep.subr.mxu0 0.0
    %1948 = vmatpush1.msra.mxu0 %v1548
    %1949 = vmatprep.subr.mxu0 0.0
    %1950 = vmatpush1.msra.mxu0 %v1549
    %1951 = vmatprep.subr.mxu0 0.0
    %1952 = vmatpush1.msra.mxu0 %v1550
    %1953 = vmatprep.mubr.f32.mxu0 %v1380
    %1954 = vmatmul.mubr.f32.gmra.mrb[0].mxu0 %v1323
    %v1955 = vpop.f32.mrb[0].mxu0
    %v1956 = vadd.f32 %v1811, %v1955
    %v1957 = vpop.f32.mrb[0].mxu0
    %1958 = vmatprep.mubr.f32.mxu0 %v1383
    %1959 = vmatmul.mubr.f32.gmra.mrb[0].mxu0 %v1326
    %v1960 = vpop.f32.mrb[0].mxu0
    %v1961 = vadd.f32 %v1816, %v1960
    %v1962 = vpop.f32.mrb[0].mxu0
    %1963 = vmatprep.mubr.f32.mxu0 %v1386
    %1964 = vmatmul.mubr.f32.gmra.mrb[0].mxu0 %v1329
    %v1965 = vpop.f32.mrb[0].mxu0
    %v1966 = vadd.f32 %v1821, %v1965
    %v1967 = vpop.f32.mrb[0].mxu0
    %1968 = vmatprep.mubr.f32.mxu0 %v1389
    %1969 = vmatmul.mubr.f32.gmra.mrb[0].mxu0 %v1332
    %v1970 = vpop.f32.mrb[0].mxu0
    %v1971 = vadd.f32 %v1826, %v1970
    %v1972 = vpop.f32.mrb[0].mxu0
    %1973 = vmatprep.mubr.f32.mxu0 %v1392
    %1974 = vmatmul.mubr.f32.gmra.mrb[0].mxu0 %v1335
    %v1975 = vpop.f32.mrb[0].mxu0
    %v1976 = vadd.f32 %v1831, %v1975
    %v1977 = vpop.f32.mrb[0].mxu0
    %1978 = vmatprep.mubr.f32.mxu0 %v1395
    %1979 = vmatmul.mubr.f32.gmra.mrb[0].mxu0 %v1338
    %v1980 = vpop.f32.mrb[0].mxu0
    %v1981 = vadd.f32 %v1836, %v1980
    %v1982 = vpop.f32.mrb[0].mxu0
    %1983 = vmatprep.mubr.f32.mxu0 %v1398
    %1984 = vmatmul.mubr.f32.gmra.mrb[0].mxu0 %v1341
    %v1985 = vpop.f32.mrb[0].mxu0
    %v1986 = vadd.f32 %v1841, %v1985
    %v1987 = vpop.f32.mrb[0].mxu0
    %1988 = vmatprep.mubr.f32.mxu0 %v1449
    %1989 = vmatmul.mubr.f32.gmra.mrb[0].mxu0 %v1441
    %v1990 = vpop.f32.mrb[0].mxu0
    %v1991 = vadd.f32 %v1846, %v1990
    %v1992 = vpop.f32.mrb[0].mxu0
    %1993 = vmatprep.mubr.f32.mxu0 %v1401
    %1994 = vmatmul.mubr.f32.gmra.mrb[0].mxu0 %v1344
    %v1995 = vpop.f32.mrb[0].mxu0
    %v1996 = vadd.f32 %v1851, %v1995
    %v1997 = vpop.f32.mrb[0].mxu0
    %1998 = vmatprep.mubr.f32.mxu0 %v1404
    %1999 = vmatmul.mubr.f32.gmra.mrb[0].mxu0 %v1347
    %v2000 = vpop.f32.mrb[0].mxu0
    %v2001 = vadd.f32 %v1856, %v2000
    %v2002 = vpop.f32.mrb[0].mxu0
    %2003 = vmatprep.mubr.f32.mxu0 %v1407
    %2004 = vmatmul.mubr.f32.gmra.mrb[0].mxu0 %v1350
    %v2005 = vpop.f32.mrb[0].mxu0
    %v2006 = vadd.f32 %v1861, %v2005
    %v2007 = vpop.f32.mrb[0].mxu0
    %2008 = vmatprep.mubr.f32.mxu0 %v1410
    %2009 = vmatmul.mubr.f32.gmra.mrb[0].mxu0 %v1353
    %v2010 = vpop.f32.mrb[0].mxu0
    %v2011 = vadd.f32 %v1866, %v2010
    %v2012 = vpop.f32.mrb[0].mxu0
    %2013 = vmatprep.mubr.f32.mxu0 %v1413
    %2014 = vmatmul.mubr.f32.gmra.mrb[0].mxu0 %v1356
    %v2015 = vpop.f32.mrb[0].mxu0
    %v2016 = vadd.f32 %v1871, %v2015
    %v2017 = vpop.f32.mrb[0].mxu0
    %2018 = vmatprep.mubr.f32.mxu0 %v1416
    %2019 = vmatmul.mubr.f32.gmra.mrb[0].mxu0 %v1359
    %v2020 = vpop.f32.mrb[0].mxu0
    %v2021 = vadd.f32 %v1876, %v2020
    %v2022 = vpop.f32.mrb[0].mxu0
    %2023 = vmatprep.mubr.f32.mxu0 %v1419
    %2024 = vmatmul.mubr.f32.gmra.mrb[0].mxu0 %v1362
    %v2025 = vpop.f32.mrb[0].mxu0
    %v2026 = vadd.f32 %v1881, %v2025
    %v2027 = vpop.f32.mrb[0].mxu0
    %2028 = vmatprep.mubr.f32.mxu0 %v1452
    %2029 = vmatmul.mubr.f32.gmra.mrb[0].mxu0 %v1444
    %v2030 = vpop.f32.mrb[0].mxu0
    %v2031 = vadd.f32 %v1886, %v2030
    %v2032 = vpop.f32.mrb[0].mxu0
    %2033 = vdwg.mxu0
    %2034 = vmatprep.subr.mxu0 0.0
    %2035 = vmatpush1.msra.mxu0 %v1551
    %2036 = vmatprep.subr.mxu0 0.0
    %2037 = vmatpush1.msra.mxu0 %v1552
    %2038 = vmatprep.subr.mxu0 0.0
    %2039 = vmatpush1.msra.mxu0 %v1553
    %2040 = vmatprep.subr.mxu0 0.0
    %2041 = vmatpush1.msra.mxu0 %v1554
    %2042 = vmatprep.subr.mxu0 0.0
    %2043 = vmatpush1.msra.mxu0 %v1555
    %2044 = vmatprep.subr.mxu0 0.0
    %2045 = vmatpush1.msra.mxu0 %v1556
    %2046 = vmatprep.subr.mxu0 0.0
    %2047 = vmatpush1.msra.mxu0 %v1557
    %2048 = vmatprep.subr.mxu0 0.0
    %2049 = vmatpush1.msra.mxu0 %v1558
    %2050 = vmatprep.subr.mxu0 0.0
    %2051 = vmatpush1.msra.mxu0 %v1559
    %2052 = vmatprep.subr.mxu0 0.0
    %2053 = vmatpush1.msra.mxu0 %v1560
    %2054 = vmatprep.subr.mxu0 0.0
    %2055 = vmatpush1.msra.mxu0 %v1561
    %2056 = vmatprep.subr.mxu0 0.0
    %2057 = vmatpush1.msra.mxu0 %v1562
    %2058 = vmatprep.subr.mxu0 0.0
    %2059 = vmatpush1.msra.mxu0 %v1563
    %2060 = vmatprep.subr.mxu0 0.0
    %2061 = vmatpush1.msra.mxu0 %v1564
    %2062 = vmatprep.subr.mxu0 0.0
    %2063 = vmatpush1.msra.mxu0 %v1565
    %2064 = vmatprep.subr.mxu0 0.0
    %2065 = vmatpush1.msra.mxu0 %v1566
    %2066 = vmatprep.subr.mxu0 0.0
    %2067 = vmatpush1.msra.mxu0 %v1567
    %2068 = vmatprep.subr.mxu0 0.0
    %2069 = vmatpush1.msra.mxu0 %v1568
    %2070 = vmatprep.subr.mxu0 0.0
    %2071 = vmatpush1.msra.mxu0 %v1569
    %2072 = vmatprep.subr.mxu0 0.0
    %2073 = vmatpush1.msra.mxu0 %v1570
    %2074 = vmatprep.subr.mxu0 0.0
    %2075 = vmatpush1.msra.mxu0 %v1571
    %2076 = vmatprep.subr.mxu0 0.0
    %2077 = vmatpush1.msra.mxu0 %v1572
    %2078 = vmatprep.subr.mxu0 0.0
    %2079 = vmatpush1.msra.mxu0 %v1573
    %2080 = vmatprep.subr.mxu0 0.0
    %2081 = vmatpush1.msra.mxu0 %v1574
    %2082 = vmatprep.subr.mxu0 0.0
    %2083 = vmatpush1.msra.mxu0 %v1575
    %2084 = vmatprep.subr.mxu0 0.0
    %2085 = vmatpush1.msra.mxu0 %v1576
    %2086 = vmatprep.subr.mxu0 0.0
    %2087 = vmatpush1.msra.mxu0 %v1577
    %2088 = vmatprep.subr.mxu0 0.0
    %2089 = vmatpush1.msra.mxu0 %v1578
    %2090 = vmatprep.subr.mxu0 0.0
    %2091 = vmatpush1.msra.mxu0 %v1579
    %2092 = vmatprep.subr.mxu0 0.0
    %2093 = vmatpush1.msra.mxu0 %v1580
    %2094 = vmatprep.subr.mxu0 0.0
    %2095 = vmatpush1.msra.mxu0 %v1581
    %2096 = vmatprep.subr.mxu0 0.0
    %2097 = vmatpush1.msra.mxu0 %v1582
    %2098 = vmatprep.mubr.f32.mxu0 %v1326
    %2099 = vmatmul.mubr.f32.gmra.mrb[0].mxu0 %v1262
    %v2100 = vpop.f32.mrb[0].mxu0
    %v2101 = vadd.f32 %v1956, %v2100
    %v2102 = vpop.f32.mrb[0].mxu0
    %2103 = vmatprep.mubr.f32.mxu0 %v1329
    %2104 = vmatmul.mubr.f32.gmra.mrb[0].mxu0 %v1263
    %v2105 = vpop.f32.mrb[0].mxu0
    %v2106 = vadd.f32 %v1961, %v2105
    %v2107 = vpop.f32.mrb[0].mxu0
    %2108 = vmatprep.mubr.f32.mxu0 %v1332
    %2109 = vmatmul.mubr.f32.gmra.mrb[0].mxu0 %v1264
    %v2110 = vpop.f32.mrb[0].mxu0
    %v2111 = vadd.f32 %v1966, %v2110
    %v2112 = vpop.f32.mrb[0].mxu0
    %2113 = vmatprep.mubr.f32.mxu0 %v1335
    %2114 = vmatmul.mubr.f32.gmra.mrb[0].mxu0 %v1265
    %v2115 = vpop.f32.mrb[0].mxu0
    %v2116 = vadd.f32 %v1971, %v2115
    %v2117 = vpop.f32.mrb[0].mxu0
    %2118 = vmatprep.mubr.f32.mxu0 %v1338
    %2119 = vmatmul.mubr.f32.gmra.mrb[0].mxu0 %v1266
    %v2120 = vpop.f32.mrb[0].mxu0
    %v2121 = vadd.f32 %v1976, %v2120
    %v2122 = vpop.f32.mrb[0].mxu0
    %2123 = vmatprep.mubr.f32.mxu0 %v1341
    %2124 = vmatmul.mubr.f32.gmra.mrb[0].mxu0 %v1267
    %v2125 = vpop.f32.mrb[0].mxu0
    %v2126 = vadd.f32 %v1981, %v2125
    %v2127 = vpop.f32.mrb[0].mxu0
    %2128 = vmatprep.mubr.f32.mxu0 %v1441
    %2129 = vmatmul.mubr.f32.gmra.mrb[0].mxu0 %v1268
    %v2130 = vpop.f32.mrb[0].mxu0
    %v2131 = vadd.f32 %v1986, %v2130
    %v2132 = vpop.f32.mrb[0].mxu0
    %2133 = vmatprep.mubr.f32.mxu0 %v272
    %2134 = vmatmul.mubr.f32.gmra.mrb[0].mxu0 %v205
    %v2135 = vpop.f32.mrb[0].mxu0
    %v2136 = vadd.f32 %v1991, %v2135
    %v2137 = vpop.f32.mrb[0].mxu0
    %2138 = vmatprep.mubr.f32.mxu0 %v1347
    %2139 = vmatmul.mubr.f32.gmra.mrb[0].mxu0 %v1270
    %v2140 = vpop.f32.mrb[0].mxu0
    %v2141 = vadd.f32 %v1996, %v2140
    %v2142 = vpop.f32.mrb[0].mxu0
    %2143 = vmatprep.mubr.f32.mxu0 %v1350
    %2144 = vmatmul.mubr.f32.gmra.mrb[0].mxu0 %v1271
    %v2145 = vpop.f32.mrb[0].mxu0
    %v2146 = vadd.f32 %v2001, %v2145
    %v2147 = vpop.f32.mrb[0].mxu0
    %2148 = vmatprep.mubr.f32.mxu0 %v1353
    %2149 = vmatmul.mubr.f32.gmra.mrb[0].mxu0 %v1272
    %v2150 = vpop.f32.mrb[0].mxu0
    %v2151 = vadd.f32 %v2006, %v2150
    %v2152 = vpop.f32.mrb[0].mxu0
    %2153 = vmatprep.mubr.f32.mxu0 %v1356
    %2154 = vmatmul.mubr.f32.gmra.mrb[0].mxu0 %v1273
    %v2155 = vpop.f32.mrb[0].mxu0
    %v2156 = vadd.f32 %v2011, %v2155
    %v2157 = vpop.f32.mrb[0].mxu0
    %2158 = vmatprep.mubr.f32.mxu0 %v1359
    %2159 = vmatmul.mubr.f32.gmra.mrb[0].mxu0 %v1274
    %v2160 = vpop.f32.mrb[0].mxu0
    %v2161 = vadd.f32 %v2016, %v2160
    %v2162 = vpop.f32.mrb[0].mxu0
    %2163 = vmatprep.mubr.f32.mxu0 %v1362
    %2164 = vmatmul.mubr.f32.gmra.mrb[0].mxu0 %v1275
    %v2165 = vpop.f32.mrb[0].mxu0
    %v2166 = vadd.f32 %v2021, %v2165
    %v2167 = vpop.f32.mrb[0].mxu0
    %2168 = vmatprep.mubr.f32.mxu0 %v1444
    %2169 = vmatmul.mubr.f32.gmra.mrb[0].mxu0 %v1276
    %v2170 = vpop.f32.mrb[0].mxu0
    %v2171 = vadd.f32 %v2026, %v2170
    %v2172 = vpop.f32.mrb[0].mxu0
    %2173 = vmatprep.mubr.f32.mxu0 %v272
    %2174 = vmatmul.mubr.f32.gmra.mrb[0].mxu0 %v205
    %v2175 = vpop.f32.mrb[0].mxu0
    %v2176 = vadd.f32 %v2031, %v2175
    %v2177 = vpop.f32.mrb[0].mxu0
    %2178 = vdwg.mxu0
    %2179 = vmatprep.subr.mxu0 0.0
    %2180 = vmatpush1.msra.mxu0 %v1583
    %2181 = vmatprep.subr.mxu0 0.0
    %2182 = vmatpush1.msra.mxu0 %v1584
    %2183 = vmatprep.subr.mxu0 0.0
    %2184 = vmatpush1.msra.mxu0 %v1585
    %2185 = vmatprep.subr.mxu0 0.0
    %2186 = vmatpush1.msra.mxu0 %v1586
    %2187 = vmatprep.subr.mxu0 0.0
    %2188 = vmatpush1.msra.mxu0 %v1587
    %2189 = vmatprep.subr.mxu0 0.0
    %2190 = vmatpush1.msra.mxu0 %v1588
    %2191 = vmatprep.subr.mxu0 0.0
    %2192 = vmatpush1.msra.mxu0 %v1589
    %2193 = vmatprep.subr.mxu0 0.0
    %2194 = vmatpush1.msra.mxu0 %v1590
    %2195 = vmatprep.subr.mxu0 0.0
    %2196 = vmatpush1.msra.mxu0 %v1591
    %2197 = vmatprep.subr.mxu0 0.0
    %2198 = vmatpush1.msra.mxu0 %v1592
    %2199 = vmatprep.subr.mxu0 0.0
    %2200 = vmatpush1.msra.mxu0 %v1593
    %2201 = vmatprep.subr.mxu0 0.0
    %2202 = vmatpush1.msra.mxu0 %v1594
    %2203 = vmatprep.subr.mxu0 0.0
    %2204 = vmatpush1.msra.mxu0 %v1595
    %2205 = vmatprep.subr.mxu0 0.0
    %2206 = vmatpush1.msra.mxu0 %v1596
    %2207 = vmatprep.subr.mxu0 0.0
    %2208 = vmatpush1.msra.mxu0 %v1597
    %2209 = vmatprep.subr.mxu0 0.0
    %2210 = vmatpush1.msra.mxu0 %v1598
    %2211 = vmatprep.subr.mxu0 0.0
    %2212 = vmatpush1.msra.mxu0 0.0
    %2213 = vmatprep.subr.mxu0 0.0
    %2214 = vmatpush1.msra.mxu0 0.0
    %2215 = vmatprep.subr.mxu0 0.0
    %2216 = vmatpush1.msra.mxu0 0.0
    %2217 = vmatprep.subr.mxu0 0.0
    %2218 = vmatpush1.msra.mxu0 0.0
    %2219 = vmatprep.subr.mxu0 0.0
    %2220 = vmatpush1.msra.mxu0 0.0
    %2221 = vmatprep.subr.mxu0 0.0
    %2222 = vmatpush1.msra.mxu0 0.0
    %2223 = vmatprep.subr.mxu0 0.0
    %2224 = vmatpush1.msra.mxu0 0.0
    %2225 = vmatprep.subr.mxu0 0.0
    %2226 = vmatpush1.msra.mxu0 0.0
    %2227 = vmatprep.subr.mxu0 0.0
    %2228 = vmatpush1.msra.mxu0 0.0
    %2229 = vmatprep.subr.mxu0 0.0
    %2230 = vmatpush1.msra.mxu0 0.0
    %2231 = vmatprep.subr.mxu0 0.0
    %2232 = vmatpush1.msra.mxu0 0.0
    %2233 = vmatprep.subr.mxu0 0.0
    %2234 = vmatpush1.msra.mxu0 0.0
    %2235 = vmatprep.subr.mxu0 0.0
    %2236 = vmatpush1.msra.mxu0 0.0
    %2237 = vmatprep.subr.mxu0 0.0
    %2238 = vmatpush1.msra.mxu0 0.0
    %2239 = vmatprep.subr.mxu0 0.0
    %2240 = vmatpush1.msra.mxu0 0.0
    %2241 = vmatprep.subr.mxu0 0.0
    %2242 = vmatpush1.msra.mxu0 0.0
    %2243 = vmatprep.mubr.f32.mxu0 0.0
    %2244 = vmatmul.mubr.f32.gmra.mrb[0].mxu0 %v1383
    %v2245 = vpop.f32.mrb[0].mxu0
    %v2246 = vadd.f32 %v2101, %v2245
    %v2247 = vpop.f32.mrb[0].mxu0
    %2248 = vmatprep.mubr.f32.mxu0 0.0
    %2249 = vmatmul.mubr.f32.gmra.mrb[0].mxu0 %v1386
    %v2250 = vpop.f32.mrb[0].mxu0
    %v2251 = vadd.f32 %v2106, %v2250
    %v2252 = vpop.f32.mrb[0].mxu0
    %2253 = vmatprep.mubr.f32.mxu0 0.0
    %2254 = vmatmul.mubr.f32.gmra.mrb[0].mxu0 %v1389
    %v2255 = vpop.f32.mrb[0].mxu0
    %v2256 = vadd.f32 %v2111, %v2255
    %v2257 = vpop.f32.mrb[0].mxu0
    %2258 = vmatprep.mubr.f32.mxu0 0.0
    %2259 = vmatmul.mubr.f32.gmra.mrb[0].mxu0 %v1392
    %v2260 = vpop.f32.mrb[0].mxu0
    %v2261 = vadd.f32 %v2116, %v2260
    %v2262 = vpop.f32.mrb[0].mxu0
    %2263 = vmatprep.mubr.f32.mxu0 0.0
    %2264 = vmatmul.mubr.f32.gmra.mrb[0].mxu0 %v1395
    %v2265 = vpop.f32.mrb[0].mxu0
    %v2266 = vadd.f32 %v2121, %v2265
    %v2267 = vpop.f32.mrb[0].mxu0
    %2268 = vmatprep.mubr.f32.mxu0 0.0
    %2269 = vmatmul.mubr.f32.gmra.mrb[0].mxu0 %v1398
    %v2270 = vpop.f32.mrb[0].mxu0
    %v2271 = vadd.f32 %v2126, %v2270
    %v2272 = vpop.f32.mrb[0].mxu0
    %2273 = vmatprep.mubr.f32.mxu0 0.0
    %2274 = vmatmul.mubr.f32.gmra.mrb[0].mxu0 %v1449
    %v2275 = vpop.f32.mrb[0].mxu0
    %v2276 = vadd.f32 %v2131, %v2275
    %v2277 = vpop.f32.mrb[0].mxu0
    %2278 = vmatprep.mubr.f32.mxu0 0.0
    %2279 = vmatmul.mubr.f32.gmra.mrb[0].mxu0 %v318
    %v2280 = vpop.f32.mrb[0].mxu0
    %v2281 = vadd.f32 %v2136, %v2280
    %v2282 = vpop.f32.mrb[0].mxu0
    %2283 = vmatprep.mubr.f32.mxu0 0.0
    %2284 = vmatmul.mubr.f32.gmra.mrb[0].mxu0 %v1404
    %v2285 = vpop.f32.mrb[0].mxu0
    %v2286 = vadd.f32 %v2141, %v2285
    %v2287 = vpop.f32.mrb[0].mxu0
    %2288 = vmatprep.mubr.f32.mxu0 0.0
    %2289 = vmatmul.mubr.f32.gmra.mrb[0].mxu0 %v1407
    %v2290 = vpop.f32.mrb[0].mxu0
    %v2291 = vadd.f32 %v2146, %v2290
    %v2292 = vpop.f32.mrb[0].mxu0
    %2293 = vmatprep.mubr.f32.mxu0 0.0
    %2294 = vmatmul.mubr.f32.gmra.mrb[0].mxu0 %v1410
    %v2295 = vpop.f32.mrb[0].mxu0
    %v2296 = vadd.f32 %v2151, %v2295
    %v2297 = vpop.f32.mrb[0].mxu0
    %2298 = vmatprep.mubr.f32.mxu0 0.0
    %2299 = vmatmul.mubr.f32.gmra.mrb[0].mxu0 %v1413
    %v2300 = vpop.f32.mrb[0].mxu0
    %v2301 = vadd.f32 %v2156, %v2300
    %v2302 = vpop.f32.mrb[0].mxu0
    %2303 = vmatprep.mubr.f32.mxu0 0.0
    %2304 = vmatmul.mubr.f32.gmra.mrb[0].mxu0 %v1416
    %v2305 = vpop.f32.mrb[0].mxu0
    %v2306 = vadd.f32 %v2161, %v2305
    %v2307 = vpop.f32.mrb[0].mxu0
    %2308 = vmatprep.mubr.f32.mxu0 0.0
    %2309 = vmatmul.mubr.f32.gmra.mrb[0].mxu0 %v1419
    %v2310 = vpop.f32.mrb[0].mxu0
    %v2311 = vadd.f32 %v2166, %v2310
    %v2312 = vpop.f32.mrb[0].mxu0
    %2313 = vmatprep.mubr.f32.mxu0 0.0
    %2314 = vmatmul.mubr.f32.gmra.mrb[0].mxu0 %v1452
    %v2315 = vpop.f32.mrb[0].mxu0
    %v2316 = vadd.f32 %v2171, %v2315
    %v2317 = vpop.f32.mrb[0].mxu0
    %2318 = vmatprep.mubr.f32.mxu0 0.0
    %2319 = vmatmul.mubr.f32.gmra.mrb[0].mxu0 %v318
    %v2320 = vpop.f32.mrb[0].mxu0
    %v2321 = vadd.f32 %v2176, %v2320
    %v2322 = vpop.f32.mrb[0].mxu0
    %2323 = vdwg.mxu0
    %v2324 = vadd.f32 %v2246, %v2251
    %v2325 = vadd.f32 %v2324, %v2256
    %v2326 = vadd.f32 %v2325, %v2261
    %v2327 = vadd.f32 %v2326, %v2266
    %v2328 = vadd.f32 %v2327, %v2271
    %v2329 = vadd.f32 %v2328, %v2276
    %v2330 = vadd.f32 %v2329, %v2281
    %v2331 = vadd.f32 %v2330, %v2286
    %v2332 = vadd.f32 %v2331, %v2291
    %v2333 = vadd.f32 %v2332, %v2296
    %v2334 = vadd.f32 %v2333, %v2301
    %v2335 = vadd.f32 %v2334, %v2306
    %v2336 = vadd.f32 %v2335, %v2311
    %v2337 = vadd.f32 %v2336, %v2316
    %v2338 = vadd.f32 %v2337, %v2321
    %v2339 = vrot.slane %v2338, 4
    %v2340 = vadd.f32 %v2338, %v2339
    %v2341 = vrot.slane %v2340, 2
    %v2342 = vadd.f32 %v2340, %v2341
    %v2343 = vrot.slane %v2342, 1
    %v2344 = vadd.f32 %v2342, %v2343
    %v2345 = vmul.f32 %v2344, 0.0078125
    %v2346 = vmul.f32 %v2246, %v2246
    %v2347 = vmul.f32 %v2251, %v2251
    %v2348 = vmul.f32 %v2256, %v2256
    %v2349 = vmul.f32 %v2261, %v2261
    %v2350 = vmul.f32 %v2266, %v2266
    %v2351 = vmul.f32 %v2271, %v2271
    %v2352 = vmul.f32 %v2276, %v2276
    %v2353 = vmul.f32 %v2281, %v2281
    %v2354 = vmul.f32 %v2286, %v2286
    %v2355 = vmul.f32 %v2291, %v2291
    %v2356 = vmul.f32 %v2296, %v2296
    %v2357 = vmul.f32 %v2301, %v2301
    %v2358 = vmul.f32 %v2306, %v2306
    %v2359 = vmul.f32 %v2311, %v2311
    %v2360 = vmul.f32 %v2316, %v2316
    %v2361 = vmul.f32 %v2321, %v2321
    %v2362 = vadd.f32 %v2346, %v2347
    %v2363 = vadd.f32 %v2362, %v2348
    %v2364 = vadd.f32 %v2363, %v2349
    %v2365 = vadd.f32 %v2364, %v2350
    %v2366 = vadd.f32 %v2365, %v2351
    %v2367 = vadd.f32 %v2366, %v2352
    %v2368 = vadd.f32 %v2367, %v2353
    %v2369 = vadd.f32 %v2368, %v2354
    %v2370 = vadd.f32 %v2369, %v2355
    %v2371 = vadd.f32 %v2370, %v2356
    %v2372 = vadd.f32 %v2371, %v2357
    %v2373 = vadd.f32 %v2372, %v2358
    %v2374 = vadd.f32 %v2373, %v2359
    %v2375 = vadd.f32 %v2374, %v2360
    %v2376 = vadd.f32 %v2375, %v2361
    %v2377 = vrot.slane %v2376, 4
    %v2378 = vadd.f32 %v2376, %v2377
    %v2379 = vrot.slane %v2378, 2
    %v2380 = vadd.f32 %v2378, %v2379
    %v2381 = vrot.slane %v2380, 1
    %v2382 = vadd.f32 %v2380, %v2381
    %v2383 = vmul.f32 %v2382, 0.0078125
    %v2384 = vmul.f32 %v2345, %v2345
    %v2385 = vsub.f32 %v2383, %v2384
    %v2386 = vmax.f32 %v2385, 0.0
    %v2387 = vld [vmem:[%s5] sm:$0x1]
    %v2388 = vadd.f32 %v2386, 1e-05
    %v2389 = vrsqrt.pop %v2388
    %v2390 = vmul.f32 %v2387, %v2389
    %v2391 = vld [vmem:[%s6] sm:$0x1]
    %v2392 = vmul.f32 %v2345, %v2390
    %v2393 = vsub.f32 %v2391, %v2392
    %v2395 = vlaneseq
    %v2396 = vshrl.u32 %v2395, 7
    %v2397 = vsub.s32 0, %v2396
    %v2398 = vrot.slane %v2390, %v2397
    %v2400 = vmul.f32 %v2246, %v2398
    %v2401 = vmul.f32 %v2251, %v2398
    %v2402 = vmul.f32 %v2256, %v2398
    %v2403 = vmul.f32 %v2261, %v2398
    %v2404 = vmul.f32 %v2266, %v2398
    %v2405 = vmul.f32 %v2271, %v2398
    %v2406 = vmul.f32 %v2276, %v2398
    %v2407 = vmul.f32 %v2281, %v2398
    %v2408 = vmul.f32 %v2286, %v2398
    %v2409 = vmul.f32 %v2291, %v2398
    %v2410 = vmul.f32 %v2296, %v2398
    %v2411 = vmul.f32 %v2301, %v2398
    %v2412 = vmul.f32 %v2306, %v2398
    %v2413 = vmul.f32 %v2311, %v2398
    %v2414 = vmul.f32 %v2316, %v2398
    %v2415 = vmul.f32 %v2321, %v2398
    %v2417 = vlaneseq
    %v2418 = vshrl.u32 %v2417, 7
    %v2419 = vsub.s32 0, %v2418
    %v2420 = vrot.slane %v2393, %v2419
    %v2422 = vadd.f32 %v2400, %v2420
    %v2423 = vadd.f32 %v2401, %v2420
    %v2424 = vadd.f32 %v2402, %v2420
    %v2425 = vadd.f32 %v2403, %v2420
    %v2426 = vadd.f32 %v2404, %v2420
    %v2427 = vadd.f32 %v2405, %v2420
    %v2428 = vadd.f32 %v2406, %v2420
    %v2429 = vadd.f32 %v2407, %v2420
    %v2430 = vadd.f32 %v2408, %v2420
    %v2431 = vadd.f32 %v2409, %v2420
    %v2432 = vadd.f32 %v2410, %v2420
    %v2433 = vadd.f32 %v2411, %v2420
    %v2434 = vadd.f32 %v2412, %v2420
    %v2435 = vadd.f32 %v2413, %v2420
    %v2436 = vadd.f32 %v2414, %v2420
    %v2437 = vadd.f32 %v2415, %v2420
    %v2438 = vmax.f32 %v2422, 0.0
    %v2439 = vmax.f32 %v2423, 0.0
    %v2440 = vmax.f32 %v2424, 0.0
    %v2441 = vmax.f32 %v2425, 0.0
    %v2442 = vmax.f32 %v2426, 0.0
    %v2443 = vmax.f32 %v2427, 0.0
    %v2444 = vmax.f32 %v2428, 0.0
    %v2445 = vmax.f32 %v2429, 0.0
    %v2446 = vmax.f32 %v2430, 0.0
    %v2447 = vmax.f32 %v2431, 0.0
    %v2448 = vmax.f32 %v2432, 0.0
    %v2449 = vmax.f32 %v2433, 0.0
    %v2450 = vmax.f32 %v2434, 0.0
    %v2451 = vmax.f32 %v2435, 0.0
    %v2452 = vmax.f32 %v2436, 0.0
    %v2453 = vmax.f32 %v2437, 0.0
    %2454 = vst [vmem:[#allocation5] sm:$0xff] %v2438
    %2455 = vst [vmem:[#allocation5 + $0x8] sm:$0xff] %v2439
    %2456 = vst [vmem:[#allocation5 + $0x10] sm:$0xff] %v2440
    %2457 = vst [vmem:[#allocation5 + $0x18] sm:$0xff] %v2441
    %2458 = vst [vmem:[#allocation5 + $0x20] sm:$0xff] %v2442
    %2459 = vst [vmem:[#allocation5 + $0x28] sm:$0xff] %v2443
    %2460 = vst [vmem:[#allocation5 + $0x30] sm:$0xff] %v2444
    %2461 = vst [vmem:[#allocation5 + $0x38] sm:$0xff] %v2445
    %2462 = vst [vmem:[#allocation5 + $0x40] sm:$0xff] %v2446
    %2463 = vst [vmem:[#allocation5 + $0x48] sm:$0xff] %v2447
    %2464 = vst [vmem:[#allocation5 + $0x50] sm:$0xff] %v2448
    %2465 = vst [vmem:[#allocation5 + $0x58] sm:$0xff] %v2449
    %2466 = vst [vmem:[#allocation5 + $0x60] sm:$0xff] %v2450
    %2467 = vst [vmem:[#allocation5 + $0x68] sm:$0xff] %v2451
    %2468 = vst [vmem:[#allocation5 + $0x70] sm:$0xff] %v2452
    %2469 = vst [vmem:[#allocation5 + $0x78] sm:$0xff] %v2453
    // Predicated region
    $region34: #{tpu_custom_call.1} parent=1 // pred_check
      _
    $region35: #{tpu_custom_call.1} parent=1 // pred_check_branch
      %2471 = sbr.rel (0) target = $region37
    $region36: #{tpu_custom_call.1} parent=1 // pred_region
      %s2473 = ssub.s32 2048, 2048
      %2474 = vsyncadd [#allocation4], %s2473
      %s2475 = sshll.u32 [#allocation5], 4
      %s2476 = int_to_ptr.vmem [resolvable:$true] %s2475
      %2481 = dma.vmem_to_hbm [thread:$0]  %s2476, 2048, %s7, [#allocation4], 128, 128, 8
    $region37: #{tpu_custom_call.1} parent=1 // pred_fallthru
      _
    // Predicated region
    $region38: #{tpu_custom_call.1} parent=1 // pred_check
      _
    $region39: #{tpu_custom_call.1} parent=1 // pred_check_branch
      %2483 = sbr.rel (0) target = $region41
    $region40: #{tpu_custom_call.1} parent=1 // pred_region
      %2484 = dma.done [#allocation4], 2048
    $region41: #{tpu_custom_call.1} parent=1 // pred_fallthru
      _
    %2485 = vsyncpa [#allocation3], 1
    %2486 = vsyncpa [#allocation4], 1

</llo_original>
